<compile_context>
chip_gen: v7x
topology: tpu7x:2x2x1
jax: 0.10.0
libtpu: 0.0.40
codegen_flags: <defaults>
</compile_context>

<pallas_src>
import functools

import jax
import jax.numpy as jnp
from jax.experimental import pallas as pl
from jax.experimental.pallas import tpu as pltpu

LANES = 128  # padded channel / output-feature width (lane-dense stores)


def _round_up(v, m):
    return (v + m - 1) // m * m


# ---------------------------------------------------------------------------
# Fused conv (VALID, stride 1) + bias + ReLU + 2x2/stride-2 max-pool kernel.
# One grid step per image: a single MXU dot over that image's im2col patches,
# then bias + ReLU + pool in the epilogue, lane-dense (q_rows, 128) store.
# ---------------------------------------------------------------------------
def _conv_pool_kernel(x_ref, w_ref, b_ref, o_ref, *, q_rows):
    # x: (4*q_rows, K), rows ordered (dy, dx, ph, pw);  w: (128, K) torch layout
    y = jax.lax.dot_general(
        x_ref[...], w_ref[...],
        dimension_numbers=(((1,), (1,)), ((), ())),
        preferred_element_type=jnp.float32)
    y = jnp.maximum(y + b_ref[...], 0.0)                    # bias + ReLU
    # 2x2/stride-2 max-pool == elementwise max of the 4 contiguous row blocks.
    p = jnp.maximum(
        jnp.maximum(y[0 * q_rows:1 * q_rows], y[1 * q_rows:2 * q_rows]),
        jnp.maximum(y[2 * q_rows:3 * q_rows], y[3 * q_rows:4 * q_rows]))
    o_ref[...] = p.astype(o_ref.dtype)


def _im2col_pool_order(x, kh, kw):
    """x: (N,H,W,C) NHWC -> cols (N*4*PH*PW, C*kh*kw).

    Rows ordered (n, dy, dx, ph, pw) where (dy, dx) indexes the 2x2 pool-window
    candidate of pooled position (ph, pw); columns ordered (c, kh, kw) to match
    a PyTorch conv weight reshaped as (Cout, Cin*KH*KW).  Single XLA gather.
    """
    N, H, W, C = x.shape
    OH, OW = H - kh + 1, W - kw + 1
    assert OH % 2 == 0 and OW % 2 == 0, "maxpool2x2 needs even conv output dims"
    PH, PW = OH // 2, OW // 2
    r = jnp.arange(OH)[:, None] + jnp.arange(kh)[None, :]        # (OH, kh)
    c_idx = jnp.arange(OW)[:, None] + jnp.arange(kw)[None, :]    # (OW, kw)
    # patches[n, oh, ow, i, j, c] = x[n, oh+i, ow+j, c]
    p = x[:, r[:, None, :, None], c_idx[None, :, None, :], :]    # (N,OH,OW,kh,kw,C)
    p = jnp.transpose(p, (0, 1, 2, 5, 3, 4))                     # (N,OH,OW,C,kh,kw)
    K = C * kh * kw
    p = p.reshape(N, OH, OW, K).reshape(N, PH, 2, PW, 2, K)      # (n,ph,dy,pw,dx,K)
    p = jnp.transpose(p, (0, 2, 4, 1, 3, 5))                     # (n,dy,dx,ph,pw,K)
    return p.reshape(N * 4 * PH * PW, K), (N, PH, PW)


def conv_relu_pool(x_nhwc, w_oihw, b, *, compute_dtype=None):
    """VALID 5x5 conv + bias + ReLU + 2x2 max-pool.
    Returns (N, PH, PW, 128) with channels [0, cout) valid (rest zero)."""
    cout, cin, kh, kw = w_oihw.shape
    assert cout <= LANES
    cols, (N, PH, PW) = _im2col_pool_order(x_nhwc, kh, kw)       # (N*4*q, K)
    K = cin * kh * kw
    w2d = jnp.pad(w_oihw.reshape(cout, K), ((0, LANES - cout), (0, 0)))
    b2d = jnp.pad(b, (0, LANES - cout)).reshape(1, LANES)
    if compute_dtype is not None:                # cast in wrapper: halves DMA bytes
        cols = cols.astype(compute_dtype)
        w2d = w2d.astype(compute_dtype)
    q = PH * PW
    out = pl.pallas_call(
        functools.partial(_conv_pool_kernel, q_rows=q),
        out_shape=jax.ShapeDtypeStruct((N * q, LANES), jnp.float32),
        grid=(N,),
        in_specs=[
            pl.BlockSpec((4 * q, K), lambda n: (n, 0)),      # im2col patches (per image)
            pl.BlockSpec((LANES, K), lambda n: (0, 0)),      # weights (out, in)
            pl.BlockSpec((1, LANES), lambda n: (0, 0)),      # bias
        ],
        out_specs=pl.BlockSpec((q, LANES), lambda n: (n, 0)),
        compiler_params=pltpu.CompilerParams(
            dimension_semantics=("parallel",)),
    )(cols, w2d, b2d)
    return out.reshape(N, PH, PW, LANES)


# ---------------------------------------------------------------------------
# Fused FC chain: relu(relu(x@W1.T+b1)@W2.T+b2)@W3.T+b3 in ONE pallas_call.
# All three weight matrices (~165 KB f32 padded) resident in VMEM, no
# intermediate HBM round trips, single lane-dense (Mp, 128) output store.
# ---------------------------------------------------------------------------
def _fc_chain_kernel(x_ref, w1_ref, b1_ref, w2_ref, b2_ref, w3_ref, b3_ref, o_ref):
    dn = (((1,), (1,)), ((), ()))       # contract last dims  (x @ w.T)
    h = jax.lax.dot_general(x_ref[...], w1_ref[...], dn,
                            preferred_element_type=jnp.float32)
    h = jnp.maximum(h + b1_ref[...], 0.0)
    h = jax.lax.dot_general(h.astype(w2_ref.dtype), w2_ref[...], dn,
                            preferred_element_type=jnp.float32)
    h = jnp.maximum(h + b2_ref[...], 0.0)
    h = jax.lax.dot_general(h.astype(w3_ref.dtype), w3_ref[...], dn,
                            preferred_element_type=jnp.float32)
    o_ref[...] = (h + b3_ref[...]).astype(o_ref.dtype)


def fc_chain(x, wf1, bf1, wf2, bf2, wf3, bf3, *, compute_dtype=None):
    M, K = x.shape
    n_out = wf3.shape[0]
    Mp = _round_up(max(M, 8), 8)

    def pad2(w, rows, cols):
        return jnp.pad(w, ((0, rows - w.shape[0]), (0, cols - w.shape[1])))

    xp = jnp.pad(x, ((0, Mp - M), (0, 0)))
    w1p = pad2(wf1, LANES, K)                  # (128, 256)
    w2p = pad2(wf2, LANES, LANES)              # (128, 128)
    w3p = pad2(wf3, LANES, LANES)              # (128, 128)
    b1p = jnp.pad(bf1, (0, LANES - bf1.shape[0])).reshape(1, LANES)
    b2p = jnp.pad(bf2, (0, LANES - bf2.shape[0])).reshape(1, LANES)
    b3p = jnp.pad(bf3, (0, LANES - bf3.shape[0])).reshape(1, LANES)
    if compute_dtype is not None:
        xp, w1p, w2p, w3p = (a.astype(compute_dtype) for a in (xp, w1p, w2p, w3p))

    out = pl.pallas_call(
        _fc_chain_kernel,
        out_shape=jax.ShapeDtypeStruct((Mp, LANES), jnp.float32),
    )(xp, w1p, b1p, w2p, b2p, w3p, b3p)
    return out[:M, :n_out]


# ---------------------------------------------------------------------------
# Full Net forward
# ---------------------------------------------------------------------------
def net_forward(x_nchw, params, *, compute_dtype=None):
    (w1, b1, w2, b2, wf1, bf1, wf2, bf2, wf3, bf3) = params
    x = jnp.transpose(x_nchw, (0, 2, 3, 1))                        # NCHW -> NHWC

    y = conv_relu_pool(x, w1, b1, compute_dtype=compute_dtype)     # (N,12,12,128)
    y = y[..., :w1.shape[0]]                                       # (N,12,12,6)
    y = conv_relu_pool(y, w2, b2, compute_dtype=compute_dtype)     # (N,4,4,128)
    y = y[..., :w2.shape[0]]                                       # (N,4,4,16)

    # PyTorch flattens NCHW-major: (c, h, w).
    y = jnp.transpose(y, (0, 3, 1, 2)).reshape(y.shape[0], -1)     # (N,256)

    return fc_chain(y, wf1, bf1, wf2, bf2, wf3, bf3,
                    compute_dtype=compute_dtype)                   # (N,10)


# ---------------------------------------------------------------------------
# Parameters, pure-JAX reference, self-test
# ---------------------------------------------------------------------------
def init_params(key):
    def uniform(k, shape, fan_in):
        bound = 1.0 / (fan_in ** 0.5)
        return jax.random.uniform(k, shape, jnp.float32, -bound, bound)

    ks = jax.random.split(key, 10)
    w1 = uniform(ks[0], (6, 1, 5, 5), 25);    b1 = uniform(ks[1], (6,), 25)
    w2 = uniform(ks[2], (16, 6, 5, 5), 150);  b2 = uniform(ks[3], (16,), 150)
    wf1 = uniform(ks[4], (120, 256), 256);    bf1 = uniform(ks[5], (120,), 256)
    wf2 = uniform(ks[6], (84, 120), 120);     bf2 = uniform(ks[7], (84,), 120)
    wf3 = uniform(ks[8], (10, 84), 84);       bf3 = uniform(ks[9], (10,), 84)
    return (w1, b1, w2, b2, wf1, bf1, wf2, bf2, wf3, bf3)


def reference_forward(x, params):
    (w1, b1, w2, b2, wf1, bf1, wf2, bf2, wf3, bf3) = params
    hi = jax.lax.Precision.HIGHEST

    def conv(x, w, b):
        y = jax.lax.conv_general_dilated(
            x, w, window_strides=(1, 1), padding="VALID",
            dimension_numbers=("NCHW", "OIHW", "NCHW"), precision=hi)
        return y + b.reshape(1, -1, 1, 1)

    def pool(x):
        return jax.lax.reduce_window(x, -jnp.inf, jax.lax.max,
                                     (1, 1, 2, 2), (1, 1, 2, 2), "VALID")

    y = pool(jax.nn.relu(conv(x, w1, b1)))
    y = pool(jax.nn.relu(conv(y, w2, b2)))
    y = y.reshape(y.shape[0], -1)
    y = jax.nn.relu(jnp.dot(y, wf1.T, precision=hi) + bf1)
    y = jax.nn.relu(jnp.dot(y, wf2.T, precision=hi) + bf2)
    return jnp.dot(y, wf3.T, precision=hi) + bf3


if __name__ == "__main__":
    key = jax.random.PRNGKey(0)
    params = init_params(key)
    x = jax.random.normal(jax.random.fold_in(key, 7), (2, 1, 28, 28),
                          dtype=jnp.float32)

    # compute_dtype=jnp.bfloat16 is the recommended setting on v6e/v7x for
    # larger shapes; keep f32 operands here for parity with the f32 reference.
    fwd = jax.jit(functools.partial(net_forward, compute_dtype=None))
    out = jax.block_until_ready(fwd(x, params))

    ref = reference_forward(x, params)
    assert out.shape == (2, 10), out.shape
    err = float(jnp.max(jnp.abs(out - ref)))
    assert jnp.allclose(out, ref, atol=2e-2, rtol=2e-2), f"mismatch: max|err|={err}"

    print("KERNEL_OK")
</pallas_src>

<mosaic_0001>
module attributes {stable_mosaic.version = 11 : i64} {
  func.func @_conv_pool_kernel(%arg0: i32, %arg1: memref<576x25xf32, #tpu.memory_space<vmem>>, %arg2: memref<128x25xf32, #tpu.memory_space<vmem>>, %arg3: memref<1x128xf32, #tpu.memory_space<vmem>>, %arg4: memref<144x128xf32, #tpu.memory_space<vmem>>) attributes {dimension_semantics = [#tpu.dimension_semantics<parallel>], iteration_bounds = array<i64: 2>, scalar_prefetch = 0 : i64, scratch_operands = 0 : i64, tpu.core_type = #tpu.core_type<tc>, window_params = [{transform_indices = @transform_0, window_bounds = array<i64: 576, 25>}, {pipeline_mode = #tpu.pipeline_mode<synchronous>, transform_indices = @transform_1, window_bounds = array<i64: 128, 25>}, {pipeline_mode = #tpu.pipeline_mode<synchronous>, transform_indices = @transform_2, window_bounds = array<i64: 1, 128>}, {transform_indices = @transform_3, window_bounds = array<i64: 144, 128>}]} {
    %c0 = arith.constant 0 : index
    %c0_0 = arith.constant 0 : index
    %0 = vector.load %arg1[%c0, %c0_0] : memref<576x25xf32, #tpu.memory_space<vmem>>, vector<576x25xf32>
    %c0_1 = arith.constant 0 : index
    %c0_2 = arith.constant 0 : index
    %1 = vector.load %arg2[%c0_1, %c0_2] : memref<128x25xf32, #tpu.memory_space<vmem>>, vector<128x25xf32>
    %cst = arith.constant dense<0.000000e+00> : vector<576x128xf32>
    %2 = tpu.matmul %0, %1, %cst {dimension_numbers = #tpu.dot_dimension_numbers<[1], [1], [0], [0], [0, 0, 1, 0], [], []>} : vector<576x25xf32>, vector<128x25xf32>, vector<576x128xf32> -> vector<576x128xf32>
    %c0_3 = arith.constant 0 : index
    %c0_4 = arith.constant 0 : index
    %3 = vector.load %arg3[%c0_3, %c0_4] : memref<1x128xf32, #tpu.memory_space<vmem>>, vector<1x128xf32>
    %4 = vector.broadcast %3 : vector<1x128xf32> to vector<576x128xf32>
    %5 = arith.addf %2, %4 : vector<576x128xf32>
    %cst_5 = arith.constant 0.000000e+00 : f32
    %6 = vector.broadcast %cst_5 : f32 to vector<576x128xf32>
    %7 = arith.maximumf %5, %6 : vector<576x128xf32>
    %8 = vector.extract_strided_slice %7 {offsets = [0, 0], sizes = [144, 128], strides = [1, 1]} : vector<576x128xf32> to vector<144x128xf32>
    %9 = vector.extract_strided_slice %7 {offsets = [144, 0], sizes = [144, 128], strides = [1, 1]} : vector<576x128xf32> to vector<144x128xf32>
    %10 = arith.maximumf %8, %9 : vector<144x128xf32>
    %11 = vector.extract_strided_slice %7 {offsets = [288, 0], sizes = [144, 128], strides = [1, 1]} : vector<576x128xf32> to vector<144x128xf32>
    %12 = vector.extract_strided_slice %7 {offsets = [432, 0], sizes = [144, 128], strides = [1, 1]} : vector<576x128xf32> to vector<144x128xf32>
    %13 = arith.maximumf %11, %12 : vector<144x128xf32>
    %14 = arith.maximumf %10, %13 : vector<144x128xf32>
    %c0_6 = arith.constant 0 : index
    %c0_7 = arith.constant 0 : index
    %15 = vector.load %arg4[%c0_6, %c0_7] : memref<144x128xf32, #tpu.memory_space<vmem>>, vector<144x128xf32>
    tpu.vector_store %arg4[%c0_6, %c0_7], %14 {strides = array<i32>} : memref<144x128xf32, #tpu.memory_space<vmem>>, vector<144x128xf32>,
    return
  }
  func.func @transform_0(%arg0: i32) -> (i32, i32) {
    %c0_i32 = arith.constant 0 : i32
    %c0_i32_0 = arith.constant 0 : i32
    return %arg0, %c0_i32 : i32, i32
  }
  func.func @transform_1(%arg0: i32) -> (i32, i32) {
    %c0_i32 = arith.constant 0 : i32
    %c0_i32_0 = arith.constant 0 : i32
    %c0_i32_1 = arith.constant 0 : i32
    return %c0_i32, %c0_i32_0 : i32, i32
  }
  func.func @transform_2(%arg0: i32) -> (i32, i32) {
    %c0_i32 = arith.constant 0 : i32
    %c0_i32_0 = arith.constant 0 : i32
    %c0_i32_1 = arith.constant 0 : i32
    return %c0_i32, %c0_i32_0 : i32, i32
  }
  func.func @transform_3(%arg0: i32) -> (i32, i32) {
    %c0_i32 = arith.constant 0 : i32
    %c0_i32_0 = arith.constant 0 : i32
    return %arg0, %c0_i32 : i32, i32
  }
}

module attributes {stable_mosaic.version = 11 : i64} {
  func.func @_conv_pool_kernel(%arg0: i32, %arg1: memref<64x150xf32, #tpu.memory_space<vmem>>, %arg2: memref<128x150xf32, #tpu.memory_space<vmem>>, %arg3: memref<1x128xf32, #tpu.memory_space<vmem>>, %arg4: memref<16x128xf32, #tpu.memory_space<vmem>>) attributes {dimension_semantics = [#tpu.dimension_semantics<parallel>], iteration_bounds = array<i64: 2>, scalar_prefetch = 0 : i64, scratch_operands = 0 : i64, tpu.core_type = #tpu.core_type<tc>, window_params = [{transform_indices = @transform_0, window_bounds = array<i64: 64, 150>}, {pipeline_mode = #tpu.pipeline_mode<synchronous>, transform_indices = @transform_1, window_bounds = array<i64: 128, 150>}, {pipeline_mode = #tpu.pipeline_mode<synchronous>, transform_indices = @transform_2, window_bounds = array<i64: 1, 128>}, {transform_indices = @transform_3, window_bounds = array<i64: 16, 128>}]} {
    %c0 = arith.constant 0 : index
    %c0_0 = arith.constant 0 : index
    %0 = vector.load %arg1[%c0, %c0_0] : memref<64x150xf32, #tpu.memory_space<vmem>>, vector<64x150xf32>
    %c0_1 = arith.constant 0 : index
    %c0_2 = arith.constant 0 : index
    %1 = vector.load %arg2[%c0_1, %c0_2] : memref<128x150xf32, #tpu.memory_space<vmem>>, vector<128x150xf32>
    %cst = arith.constant dense<0.000000e+00> : vector<64x128xf32>
    %2 = tpu.matmul %0, %1, %cst {dimension_numbers = #tpu.dot_dimension_numbers<[1], [1], [0], [0], [0, 0, 1, 0], [], []>} : vector<64x150xf32>, vector<128x150xf32>, vector<64x128xf32> -> vector<64x128xf32>
    %c0_3 = arith.constant 0 : index
    %c0_4 = arith.constant 0 : index
    %3 = vector.load %arg3[%c0_3, %c0_4] : memref<1x128xf32, #tpu.memory_space<vmem>>, vector<1x128xf32>
    %4 = vector.broadcast %3 : vector<1x128xf32> to vector<64x128xf32>
    %5 = arith.addf %2, %4 : vector<64x128xf32>
    %cst_5 = arith.constant 0.000000e+00 : f32
    %6 = vector.broadcast %cst_5 : f32 to vector<64x128xf32>
    %7 = arith.maximumf %5, %6 : vector<64x128xf32>
    %8 = vector.extract_strided_slice %7 {offsets = [0, 0], sizes = [16, 128], strides = [1, 1]} : vector<64x128xf32> to vector<16x128xf32>
    %9 = vector.extract_strided_slice %7 {offsets = [16, 0], sizes = [16, 128], strides = [1, 1]} : vector<64x128xf32> to vector<16x128xf32>
    %10 = arith.maximumf %8, %9 : vector<16x128xf32>
    %11 = vector.extract_strided_slice %7 {offsets = [32, 0], sizes = [16, 128], strides = [1, 1]} : vector<64x128xf32> to vector<16x128xf32>
    %12 = vector.extract_strided_slice %7 {offsets = [48, 0], sizes = [16, 128], strides = [1, 1]} : vector<64x128xf32> to vector<16x128xf32>
    %13 = arith.maximumf %11, %12 : vector<16x128xf32>
    %14 = arith.maximumf %10, %13 : vector<16x128xf32>
    %c0_6 = arith.constant 0 : index
    %c0_7 = arith.constant 0 : index
    %15 = vector.load %arg4[%c0_6, %c0_7] : memref<16x128xf32, #tpu.memory_space<vmem>>, vector<16x128xf32>
    tpu.vector_store %arg4[%c0_6, %c0_7], %14 {strides = array<i32>} : memref<16x128xf32, #tpu.memory_space<vmem>>, vector<16x128xf32>,
    return
  }
  func.func @transform_0(%arg0: i32) -> (i32, i32) {
    %c0_i32 = arith.constant 0 : i32
    %c0_i32_0 = arith.constant 0 : i32
    return %arg0, %c0_i32 : i32, i32
  }
  func.func @transform_1(%arg0: i32) -> (i32, i32) {
    %c0_i32 = arith.constant 0 : i32
    %c0_i32_0 = arith.constant 0 : i32
    %c0_i32_1 = arith.constant 0 : i32
    return %c0_i32, %c0_i32_0 : i32, i32
  }
  func.func @transform_2(%arg0: i32) -> (i32, i32) {
    %c0_i32 = arith.constant 0 : i32
    %c0_i32_0 = arith.constant 0 : i32
    %c0_i32_1 = arith.constant 0 : i32
    return %c0_i32, %c0_i32_0 : i32, i32
  }
  func.func @transform_3(%arg0: i32) -> (i32, i32) {
    %c0_i32 = arith.constant 0 : i32
    %c0_i32_0 = arith.constant 0 : i32
    return %arg0, %c0_i32 : i32, i32
  }
}

module attributes {stable_mosaic.version = 11 : i64} {
  func.func @_fc_chain_kernel(%arg0: memref<8x256xf32, #tpu.memory_space<vmem>>, %arg1: memref<128x256xf32, #tpu.memory_space<vmem>>, %arg2: memref<1x128xf32, #tpu.memory_space<vmem>>, %arg3: memref<128x128xf32, #tpu.memory_space<vmem>>, %arg4: memref<1x128xf32, #tpu.memory_space<vmem>>, %arg5: memref<128x128xf32, #tpu.memory_space<vmem>>, %arg6: memref<1x128xf32, #tpu.memory_space<vmem>>, %arg7: memref<8x128xf32, #tpu.memory_space<vmem>>) attributes {dimension_semantics = [], scalar_prefetch = 0 : i64, scratch_operands = 0 : i64, tpu.core_type = #tpu.core_type<tc>} {
    %c0 = arith.constant 0 : index
    %c0_0 = arith.constant 0 : index
    %0 = vector.load %arg0[%c0, %c0_0] : memref<8x256xf32, #tpu.memory_space<vmem>>, vector<8x256xf32>
    %c0_1 = arith.constant 0 : index
    %c0_2 = arith.constant 0 : index
    %1 = vector.load %arg1[%c0_1, %c0_2] : memref<128x256xf32, #tpu.memory_space<vmem>>, vector<128x256xf32>
    %cst = arith.constant dense<0.000000e+00> : vector<8x128xf32>
    %2 = tpu.matmul %0, %1, %cst {dimension_numbers = #tpu.dot_dimension_numbers<[1], [1], [0], [0], [0, 0, 1, 0], [], []>} : vector<8x256xf32>, vector<128x256xf32>, vector<8x128xf32> -> vector<8x128xf32>
    %c0_3 = arith.constant 0 : index
    %c0_4 = arith.constant 0 : index
    %3 = vector.load %arg2[%c0_3, %c0_4] : memref<1x128xf32, #tpu.memory_space<vmem>>, vector<1x128xf32>
    %4 = vector.broadcast %3 : vector<1x128xf32> to vector<8x128xf32>
    %5 = arith.addf %2, %4 : vector<8x128xf32>
    %cst_5 = arith.constant 0.000000e+00 : f32
    %6 = vector.broadcast %cst_5 : f32 to vector<8x128xf32>
    %7 = arith.maximumf %5, %6 : vector<8x128xf32>
    %c0_6 = arith.constant 0 : index
    %c0_7 = arith.constant 0 : index
    %8 = vector.load %arg3[%c0_6, %c0_7] : memref<128x128xf32, #tpu.memory_space<vmem>>, vector<128x128xf32>
    %cst_8 = arith.constant dense<0.000000e+00> : vector<8x128xf32>
    %9 = tpu.matmul %7, %8, %cst_8 {dimension_numbers = #tpu.dot_dimension_numbers<[1], [1], [0], [0], [0, 0, 1, 0], [], []>} : vector<8x128xf32>, vector<128x128xf32>, vector<8x128xf32> -> vector<8x128xf32>
    %c0_9 = arith.constant 0 : index
    %c0_10 = arith.constant 0 : index
    %10 = vector.load %arg4[%c0_9, %c0_10] : memref<1x128xf32, #tpu.memory_space<vmem>>, vector<1x128xf32>
    %11 = vector.broadcast %10 : vector<1x128xf32> to vector<8x128xf32>
    %12 = arith.addf %9, %11 : vector<8x128xf32>
    %cst_11 = arith.constant 0.000000e+00 : f32
    %13 = vector.broadcast %cst_11 : f32 to vector<8x128xf32>
    %14 = arith.maximumf %12, %13 : vector<8x128xf32>
    %c0_12 = arith.constant 0 : index
    %c0_13 = arith.constant 0 : index
    %15 = vector.load %arg5[%c0_12, %c0_13] : memref<128x128xf32, #tpu.memory_space<vmem>>, vector<128x128xf32>
    %cst_14 = arith.constant dense<0.000000e+00> : vector<8x128xf32>
    %16 = tpu.matmul %14, %15, %cst_14 {dimension_numbers = #tpu.dot_dimension_numbers<[1], [1], [0], [0], [0, 0, 1, 0], [], []>} : vector<8x128xf32>, vector<128x128xf32>, vector<8x128xf32> -> vector<8x128xf32>
    %c0_15 = arith.constant 0 : index
    %c0_16 = arith.constant 0 : index
    %17 = vector.load %arg6[%c0_15, %c0_16] : memref<1x128xf32, #tpu.memory_space<vmem>>, vector<1x128xf32>
    %18 = vector.broadcast %17 : vector<1x128xf32> to vector<8x128xf32>
    %19 = arith.addf %16, %18 : vector<8x128xf32>
    %c0_17 = arith.constant 0 : index
    %c0_18 = arith.constant 0 : index
    %20 = vector.load %arg7[%c0_17, %c0_18] : memref<8x128xf32, #tpu.memory_space<vmem>>, vector<8x128xf32>
    tpu.vector_store %arg7[%c0_17, %c0_18], %19 {strides = array<i32>} : memref<8x128xf32, #tpu.memory_space<vmem>>, vector<8x128xf32>,
    return
  }
}

</mosaic_0001>

<llo_original>
// kernel: net_forward.3
$region0: #{net_forward.3}
  #allocation0 [shape = 'u32[]', space=smem, size = 0x4, offset = 0x4, fixed_abs, tag = 'smem constant byte address 0x4 - core index']
  #allocation1 [shape = 'u32[144,128]{1,0:T(1,128)}', space=vmem, size = 0x12000, scoped, tag = 'internal scratch']
  %s0 = inlined_call_operand.vmem [shape: f32[1152,25], index: 0, kind: input, shape index: {}]
  %s1 = inlined_call_operand.vmem [shape: f32[128,25], index: 1, kind: input, shape index: {}]
  %s2 = inlined_call_operand.vmem [shape: f32[1,128], index: 2, kind: input, shape index: {}]
  %s3 = inlined_call_operand.vmem [shape: f32[288,128], index: 3, kind: output, shape index: {}]
  %s4 = sld [smem:[#allocation0]]
  $region45: #{net_forward.3} parent=0
    _
  %s6 = ssub.s32 1, %s4
  %s7 = scalar_select 0, %s6, %s4
  loop: start=0, step=1, limit=4
  $region2: #{net_forward.3} parent=0 // loop_pre_header
    _
  $region3: #{net_forward.3} parent=0 // loop_header
    %s9 = sphi 0, %s13
    %p10 = scmp.ge.s32.totalorder %s9, 4
    %s19 = sphi 0, %s21
    %s22 = sphi 0, %s19
    %s23 = sphi 0, %s22
    %s39 = sphi 0, %s23
    %s43 = sphi 0, %s43
    %s45 = sphi 0, %s43
    %s46 = sphi 0, %s45
    %s60 = sphi 0, %s46
    %s64 = sphi 0, %s64
    %s66 = sphi 0, %s64
    %s67 = sphi 0, %s66
    %s81 = sphi 0, %s67
    %s87 = sphi 0, %s89
    %s90 = sphi 0, %s87
    %s91 = sphi 0, %s90
    %s107 = sphi 0, %s91
  $region4: #{net_forward.3} parent=0 // loop_header_branch
    %12 = sbr.rel (%p10) target = $region8
  $region5: #{net_forward.3} parent=0 // loop_body
    %s14 = ssub.s32 %s9, 1
    %s15 = ssub.s32 %s9, 2
    %s16 = sadd.s32 %s9, 1
    %s17 = ssub.s32 %s9, %s16
    %p18 = scmp.eq.s32.totalorder %s17, 0
    %s20 = sadd.s32 %s19, 1
    %s21 = scalar_select %p18, %s19, %s20
    %p24 = pneg %p18
    %p25 = scmp.eq.s32.totalorder %s9, 1
    %p26 = por %p24, %p25
    %p27 = scmp.ne.s32.totalorder %s19, %s22
    %p28 = scmp.eq.s32.totalorder %s9, 0
    %p29 = por %p27, %p28
    %p30 = scmp.ne.s32.totalorder %s19, %s22
    %p31 = scmp.eq.s32.totalorder %s14, 1
    %p32 = por %p30, %p31
    %p33 = scmp.ne.s32.totalorder %s22, %s23
    %p34 = scmp.eq.s32.totalorder %s14, 0
    %p35 = por %p33, %p34
    %p36 = scmp.ne.s32.totalorder %s22, %s23
    %p37 = scmp.eq.s32.totalorder %s15, 1
    %p38 = por %p36, %p37
    %p40 = scmp.ne.s32.totalorder %s23, %s39
    %p41 = scmp.eq.s32.totalorder %s15, 0
    %p42 = por %p40, %p41
    %s44 = sadd.s32 %s43, 1
    %p47 = scmp.eq.s32.totalorder %s9, 1
    %p48 = scmp.ne.s32.totalorder %s43, %s45
    %p49 = scmp.eq.s32.totalorder %s9, 0
    %p50 = por %p48, %p49
    %p51 = scmp.ne.s32.totalorder %s43, %s45
    %p52 = scmp.eq.s32.totalorder %s14, 1
    %p53 = por %p51, %p52
    %p54 = scmp.ne.s32.totalorder %s45, %s46
    %p55 = scmp.eq.s32.totalorder %s14, 0
    %p56 = por %p54, %p55
    %p57 = scmp.ne.s32.totalorder %s45, %s46
    %p58 = scmp.eq.s32.totalorder %s15, 1
    %p59 = por %p57, %p58
    %p61 = scmp.ne.s32.totalorder %s46, %s60
    %p62 = scmp.eq.s32.totalorder %s15, 0
    %p63 = por %p61, %p62
    %s65 = sadd.s32 %s64, 1
    %p68 = scmp.eq.s32.totalorder %s9, 1
    %p69 = scmp.ne.s32.totalorder %s64, %s66
    %p70 = scmp.eq.s32.totalorder %s9, 0
    %p71 = por %p69, %p70
    %p72 = scmp.ne.s32.totalorder %s64, %s66
    %p73 = scmp.eq.s32.totalorder %s14, 1
    %p74 = por %p72, %p73
    %p75 = scmp.ne.s32.totalorder %s66, %s67
    %p76 = scmp.eq.s32.totalorder %s14, 0
    %p77 = por %p75, %p76
    %p78 = scmp.ne.s32.totalorder %s66, %s67
    %p79 = scmp.eq.s32.totalorder %s15, 1
    %p80 = por %p78, %p79
    %p82 = scmp.ne.s32.totalorder %s67, %s81
    %p83 = scmp.eq.s32.totalorder %s15, 0
    %p84 = por %p82, %p83
    %s85 = ssub.s32 %s9, %s16
    %p86 = scmp.eq.s32.totalorder %s85, 0
    %s88 = sadd.s32 %s87, 1
    %s89 = scalar_select %p86, %s87, %s88
    %p92 = pneg %p86
    %p93 = scmp.eq.s32.totalorder %s9, 1
    %p94 = por %p92, %p93
    %p95 = scmp.ne.s32.totalorder %s87, %s90
    %p96 = scmp.eq.s32.totalorder %s9, 0
    %p97 = por %p95, %p96
    %p98 = scmp.ne.s32.totalorder %s87, %s90
    %p99 = scmp.eq.s32.totalorder %s14, 1
    %p100 = por %p98, %p99
    %p101 = scmp.ne.s32.totalorder %s90, %s91
    %p102 = scmp.eq.s32.totalorder %s14, 0
    %p103 = por %p101, %p102
    %p104 = scmp.ne.s32.totalorder %s90, %s91
    %p105 = scmp.eq.s32.totalorder %s15, 1
    %p106 = por %p104, %p105
    %p108 = scmp.ne.s32.totalorder %s91, %s107
    %p109 = scmp.eq.s32.totalorder %s15, 0
    %p110 = por %p108, %p109
    %p111 = scmp.le.s32.totalorder 1, %s9
    %p112 = scmp.lt.s32.totalorder %s9, 3
    %p113 = pnand %p111, %p112
    %p114 = pneg %p113
    // Predicated region
    $region9: #{net_forward.3} parent=5 // pred_check
      _
    $region10: #{net_forward.3} parent=5 // pred_check_branch
      %116 = sbr.rel (%p113) target = $region12
    $region11: #{net_forward.3} parent=5 // pred_region
      %s117 = ssub.s32 %s9, 1
      // Predicated region
      $region13: #{net_forward.3} parent=11 // pred_check
        %p118 = pneg %p56
      $region14: #{net_forward.3} parent=11 // pred_check_branch
        %120 = sbr.rel (%p118) target = $region16
      $region15: #{net_forward.3} parent=11 // pred_region
        _
      $region16: #{net_forward.3} parent=11 // pred_fallthru
        _
      // Predicated region
      $region17: #{net_forward.3} parent=11 // pred_check
        %p121 = pneg %p77
      $region18: #{net_forward.3} parent=11 // pred_check_branch
        %123 = sbr.rel (%p121) target = $region20
      $region19: #{net_forward.3} parent=11 // pred_region
        _
      $region20: #{net_forward.3} parent=11 // pred_fallthru
        _
    $region12: #{net_forward.3} parent=5 // pred_fallthru
      _
    %p124 = scmp.lt.s32.totalorder %s9, 2
    // Predicated region
    $region21: #{net_forward.3} parent=5 // pred_check
      %p125 = pneg %p124
    $region22: #{net_forward.3} parent=5 // pred_check_branch
      %127 = sbr.rel (%p125) target = $region24
    $region23: #{net_forward.3} parent=5 // pred_region
      // Predicated region
      $region25: #{net_forward.3} parent=23 // pred_check
        %p128 = pneg %p29
      $region26: #{net_forward.3} parent=23 // pred_check_branch
        %130 = sbr.rel (%p128) target = $region28
      $region27: #{net_forward.3} parent=23 // pred_region
        %s131 = smul.u32 72, %s9
        %p132 = scmp.lt.s32.totalorder %s131, 143
        %s133 = scalar_select %p132, %s131, 143
        %s134 = smul.addr %s133, 8
        %s135 = scalar_lea.vmem %s0, %s134
        %s136 = smul.u32 72, %s9
      $region28: #{net_forward.3} parent=23 // pred_fallthru
        _
    $region24: #{net_forward.3} parent=5 // pred_fallthru
      _
    %p137 = scmp.le.s32.totalorder 1, %s9
    %p138 = scmp.lt.s32.totalorder %s9, 3
    %p139 = pnand %p137, %p138
    %p140 = pneg %p139
    // Predicated region
    $region29: #{net_forward.3} parent=5 // pred_check
      _
    $region30: #{net_forward.3} parent=5 // pred_check_branch
      %142 = sbr.rel (%p139) target = $region32
    $region31: #{net_forward.3} parent=5 // pred_region
      %s143 = ssub.s32 %s9, 1
      %s144 = smul.u32 72, %s14
      %p145 = scmp.lt.s32.totalorder %s144, 143
      %s146 = scalar_select %p145, %s144, 143
      %s147 = smul.addr %s146, 8
      %s148 = scalar_lea.vmem %s0, %s147
      %p149 = pneg %p35
      %p150 = pneg %p32
      %p151 = pneg %p56
      %p152 = pneg %p53
      %p153 = pneg %p77
      %p154 = pneg %p74
      %p155 = pneg %p103
      %p156 = pneg %p100
      %s157 = smul.u32 18, %s14
      %p158 = scmp.lt.s32.totalorder %s157, 35
      %s159 = scalar_select %p158, %s157, 35
      %s160 = smul.addr %s159, 8
      %s161 = scalar_lea.vmem %s3, %s160
      %s162 = smul.u32 72, %s14
      %p163 = scmp.lt.s32.totalorder %s162, 143
      %s164 = scalar_select %p163, %s162, 143
      %s165 = smul.addr %s164, 8
      %s166 = scalar_lea.vmem %s0, %s165
      %s167 = smul.u32 72, %s14
      %s168 = smul.u32 18, %s14
      %p169 = scmp.lt.s32.totalorder %s168, 35
      %s170 = scalar_select %p169, %s168, 35
      %s171 = smul.addr %s170, 8
      %s172 = scalar_lea.vmem %s3, %s171
      %s173 = smul.u32 18, %s14
      %v174 = vld [vmem:[%s166] sm:$0xff]
      %v175 = vld [vmem:[%s166 + $0x8] sm:$0xff]
      %v176 = vld [vmem:[%s166 + $0x10] sm:$0xff]
      %v177 = vld [vmem:[%s166 + $0x18] sm:$0xff]
      %v178 = vld [vmem:[%s166 + $0x20] sm:$0xff]
      %v179 = vld [vmem:[%s166 + $0x28] sm:$0xff]
      %v180 = vld [vmem:[%s166 + $0x30] sm:$0xff]
      %v181 = vld [vmem:[%s166 + $0x38] sm:$0xff]
      %v182 = vld [vmem:[%s166 + $0x40] sm:$0xff]
      %v183 = vld [vmem:[%s166 + $0x48] sm:$0xff]
      %v184 = vld [vmem:[%s166 + $0x50] sm:$0xff]
      %v185 = vld [vmem:[%s166 + $0x58] sm:$0xff]
      %v186 = vld [vmem:[%s166 + $0x60] sm:$0xff]
      %v187 = vld [vmem:[%s166 + $0x68] sm:$0xff]
      %v188 = vld [vmem:[%s166 + $0x70] sm:$0xff]
      %v189 = vld [vmem:[%s166 + $0x78] sm:$0xff]
      %v190 = vld [vmem:[%s166 + $0x80] sm:$0xff]
      %v191 = vld [vmem:[%s166 + $0x88] sm:$0xff]
      %v192 = vld [vmem:[%s166 + $0x90] sm:$0xff]
      %v193 = vld [vmem:[%s166 + $0x98] sm:$0xff]
      %v194 = vld [vmem:[%s166 + $0xa0] sm:$0xff]
      %v195 = vld [vmem:[%s166 + $0xa8] sm:$0xff]
      %v196 = vld [vmem:[%s166 + $0xb0] sm:$0xff]
      %v197 = vld [vmem:[%s166 + $0xb8] sm:$0xff]
      %v198 = vld [vmem:[%s166 + $0xc0] sm:$0xff]
      %v199 = vld [vmem:[%s166 + $0xc8] sm:$0xff]
      %v200 = vld [vmem:[%s166 + $0xd0] sm:$0xff]
      %v201 = vld [vmem:[%s166 + $0xd8] sm:$0xff]
      %v202 = vld [vmem:[%s166 + $0xe0] sm:$0xff]
      %v203 = vld [vmem:[%s166 + $0xe8] sm:$0xff]
      %v204 = vld [vmem:[%s166 + $0xf0] sm:$0xff]
      %v205 = vld [vmem:[%s166 + $0xf8] sm:$0xff]
      %v206 = vld [vmem:[%s166 + $0x100] sm:$0xff]
      %v207 = vld [vmem:[%s166 + $0x108] sm:$0xff]
      %v208 = vld [vmem:[%s166 + $0x110] sm:$0xff]
      %v209 = vld [vmem:[%s166 + $0x118] sm:$0xff]
      %v210 = vld [vmem:[%s166 + $0x120] sm:$0xff]
      %v211 = vld [vmem:[%s166 + $0x128] sm:$0xff]
      %v212 = vld [vmem:[%s166 + $0x130] sm:$0xff]
      %v213 = vld [vmem:[%s166 + $0x138] sm:$0xff]
      %v214 = vld [vmem:[%s166 + $0x140] sm:$0xff]
      %v215 = vld [vmem:[%s166 + $0x148] sm:$0xff]
      %v216 = vld [vmem:[%s166 + $0x150] sm:$0xff]
      %v217 = vld [vmem:[%s166 + $0x158] sm:$0xff]
      %v218 = vld [vmem:[%s166 + $0x160] sm:$0xff]
      %v219 = vld [vmem:[%s166 + $0x168] sm:$0xff]
      %v220 = vld [vmem:[%s166 + $0x170] sm:$0xff]
      %v221 = vld [vmem:[%s166 + $0x178] sm:$0xff]
      %v222 = vld [vmem:[%s166 + $0x180] sm:$0xff]
      %v223 = vld [vmem:[%s166 + $0x188] sm:$0xff]
      %v224 = vld [vmem:[%s166 + $0x190] sm:$0xff]
      %v225 = vld [vmem:[%s166 + $0x198] sm:$0xff]
      %v226 = vld [vmem:[%s166 + $0x1a0] sm:$0xff]
      %v227 = vld [vmem:[%s166 + $0x1a8] sm:$0xff]
      %v228 = vld [vmem:[%s166 + $0x1b0] sm:$0xff]
      %v229 = vld [vmem:[%s166 + $0x1b8] sm:$0xff]
      %v230 = vld [vmem:[%s166 + $0x1c0] sm:$0xff]
      %v231 = vld [vmem:[%s166 + $0x1c8] sm:$0xff]
      %v232 = vld [vmem:[%s166 + $0x1d0] sm:$0xff]
      %v233 = vld [vmem:[%s166 + $0x1d8] sm:$0xff]
      %v234 = vld [vmem:[%s166 + $0x1e0] sm:$0xff]
      %v235 = vld [vmem:[%s166 + $0x1e8] sm:$0xff]
      %v236 = vld [vmem:[%s166 + $0x1f0] sm:$0xff]
      %v237 = vld [vmem:[%s166 + $0x1f8] sm:$0xff]
      %v238 = vld [vmem:[%s166 + $0x200] sm:$0xff]
      %v239 = vld [vmem:[%s166 + $0x208] sm:$0xff]
      %v240 = vld [vmem:[%s166 + $0x210] sm:$0xff]
      %v241 = vld [vmem:[%s166 + $0x218] sm:$0xff]
      %v242 = vld [vmem:[%s166 + $0x220] sm:$0xff]
      %v243 = vld [vmem:[%s166 + $0x228] sm:$0xff]
      %v244 = vld [vmem:[%s166 + $0x230] sm:$0xff]
      %v245 = vld [vmem:[%s166 + $0x238] sm:$0xff]
      %v246 = vld [vmem:[%s1] sm:$0xff]
      %v247 = vld [vmem:[%s1 + $0x8] sm:$0xff]
      %v248 = vld [vmem:[%s1 + $0x10] sm:$0xff]
      %v249 = vld [vmem:[%s1 + $0x18] sm:$0xff]
      %v250 = vld [vmem:[%s1 + $0x20] sm:$0xff]
      %v251 = vld [vmem:[%s1 + $0x28] sm:$0xff]
      %v252 = vld [vmem:[%s1 + $0x30] sm:$0xff]
      %v253 = vld [vmem:[%s1 + $0x38] sm:$0xff]
      %v254 = vld [vmem:[%s1 + $0x40] sm:$0xff]
      %v255 = vld [vmem:[%s1 + $0x48] sm:$0xff]
      %v256 = vld [vmem:[%s1 + $0x50] sm:$0xff]
      %v257 = vld [vmem:[%s1 + $0x58] sm:$0xff]
      %v258 = vld [vmem:[%s1 + $0x60] sm:$0xff]
      %v259 = vld [vmem:[%s1 + $0x68] sm:$0xff]
      %v260 = vld [vmem:[%s1 + $0x70] sm:$0xff]
      %v261 = vld [vmem:[%s1 + $0x78] sm:$0xff]
      %v262 = vld [vmem:[%s2] sm:$0x1]
      %v264 = vlaneseq
      %v265 = vshrl.u32 %v264, 7
      %v266 = vsub.s32 0, %v265
      %v267 = vrot.slane %v262, %v266
      %vm269 = vcmask 203776
      %v271 = vsel %vm269, %v174, 0
      %v274 = vsel %vm269, %v175, 0
      %v277 = vsel %vm269, %v176, 0
      %v280 = vsel %vm269, %v177, 0
      %v283 = vsel %vm269, %v178, 0
      %v286 = vsel %vm269, %v179, 0
      %v289 = vsel %vm269, %v180, 0
      %v292 = vsel %vm269, %v181, 0
      %v295 = vsel %vm269, %v182, 0
      %v298 = vsel %vm269, %v183, 0
      %v301 = vsel %vm269, %v184, 0
      %v304 = vsel %vm269, %v185, 0
      %v307 = vsel %vm269, %v186, 0
      %v310 = vsel %vm269, %v187, 0
      %v313 = vsel %vm269, %v188, 0
      %v316 = vsel %vm269, %v189, 0
      %v319 = vsel %vm269, %v190, 0
      %v322 = vsel %vm269, %v191, 0
      %v325 = vsel %vm269, %v192, 0
      %v328 = vsel %vm269, %v193, 0
      %v331 = vsel %vm269, %v194, 0
      %v334 = vsel %vm269, %v195, 0
      %v337 = vsel %vm269, %v196, 0
      %v340 = vsel %vm269, %v197, 0
      %v343 = vsel %vm269, %v198, 0
      %v346 = vsel %vm269, %v199, 0
      %v349 = vsel %vm269, %v200, 0
      %v352 = vsel %vm269, %v201, 0
      %v355 = vsel %vm269, %v202, 0
      %v358 = vsel %vm269, %v203, 0
      %v361 = vsel %vm269, %v204, 0
      %v364 = vsel %vm269, %v205, 0
      %v367 = vsel %vm269, %v206, 0
      %v370 = vsel %vm269, %v207, 0
      %v373 = vsel %vm269, %v208, 0
      %v376 = vsel %vm269, %v209, 0
      %v379 = vsel %vm269, %v210, 0
      %v382 = vsel %vm269, %v211, 0
      %v385 = vsel %vm269, %v212, 0
      %v388 = vsel %vm269, %v213, 0
      %v391 = vsel %vm269, %v214, 0
      %v394 = vsel %vm269, %v215, 0
      %v397 = vsel %vm269, %v216, 0
      %v400 = vsel %vm269, %v217, 0
      %v403 = vsel %vm269, %v218, 0
      %v406 = vsel %vm269, %v219, 0
      %v409 = vsel %vm269, %v220, 0
      %v412 = vsel %vm269, %v221, 0
      %v415 = vsel %vm269, %v222, 0
      %v418 = vsel %vm269, %v223, 0
      %v421 = vsel %vm269, %v224, 0
      %v424 = vsel %vm269, %v225, 0
      %v427 = vsel %vm269, %v226, 0
      %v430 = vsel %vm269, %v227, 0
      %v433 = vsel %vm269, %v228, 0
      %v436 = vsel %vm269, %v229, 0
      %v439 = vsel %vm269, %v230, 0
      %v442 = vsel %vm269, %v231, 0
      %v445 = vsel %vm269, %v232, 0
      %v448 = vsel %vm269, %v233, 0
      %v451 = vsel %vm269, %v234, 0
      %v454 = vsel %vm269, %v235, 0
      %v457 = vsel %vm269, %v236, 0
      %v460 = vsel %vm269, %v237, 0
      %v463 = vsel %vm269, %v238, 0
      %v466 = vsel %vm269, %v239, 0
      %v469 = vsel %vm269, %v240, 0
      %v472 = vsel %vm269, %v241, 0
      %v475 = vsel %vm269, %v242, 0
      %v478 = vsel %vm269, %v243, 0
      %v481 = vsel %vm269, %v244, 0
      %v484 = vsel %vm269, %v245, 0
      %v487 = vsel %vm269, %v246, 0
      %v490 = vsel %vm269, %v247, 0
      %v493 = vsel %vm269, %v248, 0
      %v496 = vsel %vm269, %v249, 0
      %v499 = vsel %vm269, %v250, 0
      %v502 = vsel %vm269, %v251, 0
      %v505 = vsel %vm269, %v252, 0
      %v508 = vsel %vm269, %v253, 0
      %v511 = vsel %vm269, %v254, 0
      %v514 = vsel %vm269, %v255, 0
      %v517 = vsel %vm269, %v256, 0
      %v520 = vsel %vm269, %v257, 0
      %v523 = vsel %vm269, %v258, 0
      %v526 = vsel %vm269, %v259, 0
      %v529 = vsel %vm269, %v260, 0
      %v532 = vsel %vm269, %v261, 0
      %534 = vmatprep.subr.mxu0 0.0
      %535 = vmatpush1.xpose.msra.mxu0 %v487
      %536 = vmatprep.subr.mxu0 0.0
      %537 = vmatpush1.xpose.msra.mxu0 %v490
      %538 = vmatprep.subr.mxu0 0.0
      %539 = vmatpush1.xpose.msra.mxu0 %v493
      %540 = vmatprep.subr.mxu0 0.0
      %541 = vmatpush1.xpose.msra.mxu0 %v496
      %542 = vmatprep.subr.mxu0 0.0
      %543 = vmatpush1.xpose.msra.mxu0 %v499
      %544 = vmatprep.subr.mxu0 0.0
      %545 = vmatpush1.xpose.msra.mxu0 %v502
      %546 = vmatprep.subr.mxu0 0.0
      %547 = vmatpush1.xpose.msra.mxu0 %v505
      %548 = vmatprep.subr.mxu0 0.0
      %549 = vmatpush1.xpose.msra.mxu0 %v508
      %550 = vmatprep.subr.mxu0 0.0
      %551 = vmatpush1.xpose.msra.mxu0 %v511
      %552 = vmatprep.subr.mxu0 0.0
      %553 = vmatpush1.xpose.msra.mxu0 %v514
      %554 = vmatprep.subr.mxu0 0.0
      %555 = vmatpush1.xpose.msra.mxu0 %v517
      %556 = vmatprep.subr.mxu0 0.0
      %557 = vmatpush1.xpose.msra.mxu0 %v520
      %558 = vmatprep.subr.mxu0 0.0
      %559 = vmatpush1.xpose.msra.mxu0 %v523
      %560 = vmatprep.subr.mxu0 0.0
      %561 = vmatpush1.xpose.msra.mxu0 %v526
      %562 = vmatprep.subr.mxu0 0.0
      %563 = vmatpush1.xpose.msra.mxu0 %v529
      %564 = vmatprep.subr.mxu0 0.0
      %565 = vmatpush1.xpose.msra.mxu0 %v532
      %566 = vmatprep.subr.mxu0 0.0
      %567 = vmatpush1.xpose.msra.mxu0 0.0
      %568 = vmatprep.subr.mxu0 0.0
      %569 = vmatpush1.xpose.msra.mxu0 0.0
      %570 = vmatprep.subr.mxu0 0.0
      %571 = vmatpush1.xpose.msra.mxu0 0.0
      %572 = vmatprep.subr.mxu0 0.0
      %573 = vmatpush1.xpose.msra.mxu0 0.0
      %574 = vmatprep.subr.mxu0 0.0
      %575 = vmatpush1.xpose.msra.mxu0 0.0
      %576 = vmatprep.subr.mxu0 0.0
      %577 = vmatpush1.xpose.msra.mxu0 0.0
      %578 = vmatprep.subr.mxu0 0.0
      %579 = vmatpush1.xpose.msra.mxu0 0.0
      %580 = vmatprep.subr.mxu0 0.0
      %581 = vmatpush1.xpose.msra.mxu0 0.0
      %582 = vmatprep.subr.mxu0 0.0
      %583 = vmatpush1.xpose.msra.mxu0 0.0
      %584 = vmatprep.subr.mxu0 0.0
      %585 = vmatpush1.xpose.msra.mxu0 0.0
      %586 = vmatprep.subr.mxu0 0.0
      %587 = vmatpush1.xpose.msra.mxu0 0.0
      %588 = vmatprep.subr.mxu0 0.0
      %589 = vmatpush1.xpose.msra.mxu0 0.0
      %590 = vmatprep.subr.mxu0 0.0
      %591 = vmatpush1.xpose.msra.mxu0 0.0
      %592 = vmatprep.subr.mxu0 0.0
      %593 = vmatpush1.xpose.msra.mxu0 0.0
      %594 = vmatprep.subr.mxu0 0.0
      %595 = vmatpush1.xpose.msra.mxu0 0.0
      %596 = vmatprep.subr.mxu0 0.0
      %597 = vmatpush1.xpose.msra.mxu0 0.0
      %598 = vmatprep.mubr.f32.mxu0 0.0
      %599 = vmatmul.mubr.f32.gmra.mrb[0].mxu0 %v271
      %v600 = vpop.f32.mrb[0].mxu0
      %v601 = vadd.f32 %v267, %v600
      %v602 = vpop.f32.mrb[0].mxu0
      %603 = vmatprep.mubr.f32.mxu0 0.0
      %604 = vmatmul.mubr.f32.gmra.mrb[0].mxu0 %v274
      %v605 = vpop.f32.mrb[0].mxu0
      %v606 = vadd.f32 %v267, %v605
      %v607 = vpop.f32.mrb[0].mxu0
      %608 = vmatprep.mubr.f32.mxu0 0.0
      %609 = vmatmul.mubr.f32.gmra.mrb[0].mxu0 %v277
      %v610 = vpop.f32.mrb[0].mxu0
      %v611 = vadd.f32 %v267, %v610
      %v612 = vpop.f32.mrb[0].mxu0
      %613 = vmatprep.mubr.f32.mxu0 0.0
      %614 = vmatmul.mubr.f32.gmra.mrb[0].mxu0 %v280
      %v615 = vpop.f32.mrb[0].mxu0
      %v616 = vadd.f32 %v267, %v615
      %v617 = vpop.f32.mrb[0].mxu0
      %618 = vmatprep.mubr.f32.mxu0 0.0
      %619 = vmatmul.mubr.f32.gmra.mrb[0].mxu0 %v283
      %v620 = vpop.f32.mrb[0].mxu0
      %v621 = vadd.f32 %v267, %v620
      %v622 = vpop.f32.mrb[0].mxu0
      %623 = vmatprep.mubr.f32.mxu0 0.0
      %624 = vmatmul.mubr.f32.gmra.mrb[0].mxu0 %v286
      %v625 = vpop.f32.mrb[0].mxu0
      %v626 = vadd.f32 %v267, %v625
      %v627 = vpop.f32.mrb[0].mxu0
      %628 = vmatprep.mubr.f32.mxu0 0.0
      %629 = vmatmul.mubr.f32.gmra.mrb[0].mxu0 %v289
      %v630 = vpop.f32.mrb[0].mxu0
      %v631 = vadd.f32 %v267, %v630
      %v632 = vpop.f32.mrb[0].mxu0
      %633 = vmatprep.mubr.f32.mxu0 0.0
      %634 = vmatmul.mubr.f32.gmra.mrb[0].mxu0 %v292
      %v635 = vpop.f32.mrb[0].mxu0
      %v636 = vadd.f32 %v267, %v635
      %v637 = vpop.f32.mrb[0].mxu0
      %638 = vmatprep.mubr.f32.mxu0 0.0
      %639 = vmatmul.mubr.f32.gmra.mrb[0].mxu0 %v295
      %v640 = vpop.f32.mrb[0].mxu0
      %v641 = vadd.f32 %v267, %v640
      %v642 = vpop.f32.mrb[0].mxu0
      %643 = vmatprep.mubr.f32.mxu0 0.0
      %644 = vmatmul.mubr.f32.gmra.mrb[0].mxu0 %v298
      %v645 = vpop.f32.mrb[0].mxu0
      %v646 = vadd.f32 %v267, %v645
      %v647 = vpop.f32.mrb[0].mxu0
      %648 = vmatprep.mubr.f32.mxu0 0.0
      %649 = vmatmul.mubr.f32.gmra.mrb[0].mxu0 %v301
      %v650 = vpop.f32.mrb[0].mxu0
      %v651 = vadd.f32 %v267, %v650
      %v652 = vpop.f32.mrb[0].mxu0
      %653 = vmatprep.mubr.f32.mxu0 0.0
      %654 = vmatmul.mubr.f32.gmra.mrb[0].mxu0 %v304
      %v655 = vpop.f32.mrb[0].mxu0
      %v656 = vadd.f32 %v267, %v655
      %v657 = vpop.f32.mrb[0].mxu0
      %658 = vmatprep.mubr.f32.mxu0 0.0
      %659 = vmatmul.mubr.f32.gmra.mrb[0].mxu0 %v307
      %v660 = vpop.f32.mrb[0].mxu0
      %v661 = vadd.f32 %v267, %v660
      %v662 = vpop.f32.mrb[0].mxu0
      %663 = vmatprep.mubr.f32.mxu0 0.0
      %664 = vmatmul.mubr.f32.gmra.mrb[0].mxu0 %v310
      %v665 = vpop.f32.mrb[0].mxu0
      %v666 = vadd.f32 %v267, %v665
      %v667 = vpop.f32.mrb[0].mxu0
      %668 = vmatprep.mubr.f32.mxu0 0.0
      %669 = vmatmul.mubr.f32.gmra.mrb[0].mxu0 %v313
      %v670 = vpop.f32.mrb[0].mxu0
      %v671 = vadd.f32 %v267, %v670
      %v672 = vpop.f32.mrb[0].mxu0
      %673 = vmatprep.mubr.f32.mxu0 0.0
      %674 = vmatmul.mubr.f32.gmra.mrb[0].mxu0 %v316
      %v675 = vpop.f32.mrb[0].mxu0
      %v676 = vadd.f32 %v267, %v675
      %v677 = vpop.f32.mrb[0].mxu0
      %678 = vmatprep.mubr.f32.mxu0 0.0
      %679 = vmatmul.mubr.f32.gmra.mrb[0].mxu0 %v319
      %v680 = vpop.f32.mrb[0].mxu0
      %v681 = vadd.f32 %v267, %v680
      %v682 = vpop.f32.mrb[0].mxu0
      %683 = vmatprep.mubr.f32.mxu0 0.0
      %684 = vmatmul.mubr.f32.gmra.mrb[0].mxu0 %v322
      %v685 = vpop.f32.mrb[0].mxu0
      %v686 = vadd.f32 %v267, %v685
      %v687 = vpop.f32.mrb[0].mxu0
      %688 = vmatprep.mubr.f32.mxu0 0.0
      %689 = vmatmul.mubr.f32.gmra.mrb[0].mxu0 %v325
      %v690 = vpop.f32.mrb[0].mxu0
      %v691 = vadd.f32 %v267, %v690
      %v692 = vpop.f32.mrb[0].mxu0
      %693 = vmatprep.mubr.f32.mxu0 0.0
      %694 = vmatmul.mubr.f32.gmra.mrb[0].mxu0 %v328
      %v695 = vpop.f32.mrb[0].mxu0
      %v696 = vadd.f32 %v267, %v695
      %v697 = vpop.f32.mrb[0].mxu0
      %698 = vmatprep.mubr.f32.mxu0 0.0
      %699 = vmatmul.mubr.f32.gmra.mrb[0].mxu0 %v331
      %v700 = vpop.f32.mrb[0].mxu0
      %v701 = vadd.f32 %v267, %v700
      %v702 = vpop.f32.mrb[0].mxu0
      %703 = vmatprep.mubr.f32.mxu0 0.0
      %704 = vmatmul.mubr.f32.gmra.mrb[0].mxu0 %v334
      %v705 = vpop.f32.mrb[0].mxu0
      %v706 = vadd.f32 %v267, %v705
      %v707 = vpop.f32.mrb[0].mxu0
      %708 = vmatprep.mubr.f32.mxu0 0.0
      %709 = vmatmul.mubr.f32.gmra.mrb[0].mxu0 %v337
      %v710 = vpop.f32.mrb[0].mxu0
      %v711 = vadd.f32 %v267, %v710
      %v712 = vpop.f32.mrb[0].mxu0
      %713 = vmatprep.mubr.f32.mxu0 0.0
      %714 = vmatmul.mubr.f32.gmra.mrb[0].mxu0 %v340
      %v715 = vpop.f32.mrb[0].mxu0
      %v716 = vadd.f32 %v267, %v715
      %v717 = vpop.f32.mrb[0].mxu0
      %718 = vmatprep.mubr.f32.mxu0 0.0
      %719 = vmatmul.mubr.f32.gmra.mrb[0].mxu0 %v343
      %v720 = vpop.f32.mrb[0].mxu0
      %v721 = vadd.f32 %v267, %v720
      %v722 = vpop.f32.mrb[0].mxu0
      %723 = vmatprep.mubr.f32.mxu0 0.0
      %724 = vmatmul.mubr.f32.gmra.mrb[0].mxu0 %v346
      %v725 = vpop.f32.mrb[0].mxu0
      %v726 = vadd.f32 %v267, %v725
      %v727 = vpop.f32.mrb[0].mxu0
      %728 = vmatprep.mubr.f32.mxu0 0.0
      %729 = vmatmul.mubr.f32.gmra.mrb[0].mxu0 %v349
      %v730 = vpop.f32.mrb[0].mxu0
      %v731 = vadd.f32 %v267, %v730
      %v732 = vpop.f32.mrb[0].mxu0
      %733 = vmatprep.mubr.f32.mxu0 0.0
      %734 = vmatmul.mubr.f32.gmra.mrb[0].mxu0 %v352
      %v735 = vpop.f32.mrb[0].mxu0
      %v736 = vadd.f32 %v267, %v735
      %v737 = vpop.f32.mrb[0].mxu0
      %738 = vmatprep.mubr.f32.mxu0 0.0
      %739 = vmatmul.mubr.f32.gmra.mrb[0].mxu0 %v355
      %v740 = vpop.f32.mrb[0].mxu0
      %v741 = vadd.f32 %v267, %v740
      %v742 = vpop.f32.mrb[0].mxu0
      %743 = vmatprep.mubr.f32.mxu0 0.0
      %744 = vmatmul.mubr.f32.gmra.mrb[0].mxu0 %v358
      %v745 = vpop.f32.mrb[0].mxu0
      %v746 = vadd.f32 %v267, %v745
      %v747 = vpop.f32.mrb[0].mxu0
      %748 = vmatprep.mubr.f32.mxu0 0.0
      %749 = vmatmul.mubr.f32.gmra.mrb[0].mxu0 %v361
      %v750 = vpop.f32.mrb[0].mxu0
      %v751 = vadd.f32 %v267, %v750
      %v752 = vpop.f32.mrb[0].mxu0
      %753 = vmatprep.mubr.f32.mxu0 0.0
      %754 = vmatmul.mubr.f32.gmra.mrb[0].mxu0 %v364
      %v755 = vpop.f32.mrb[0].mxu0
      %v756 = vadd.f32 %v267, %v755
      %v757 = vpop.f32.mrb[0].mxu0
      %758 = vmatprep.mubr.f32.mxu0 0.0
      %759 = vmatmul.mubr.f32.gmra.mrb[0].mxu0 %v367
      %v760 = vpop.f32.mrb[0].mxu0
      %v761 = vadd.f32 %v267, %v760
      %v762 = vpop.f32.mrb[0].mxu0
      %763 = vmatprep.mubr.f32.mxu0 0.0
      %764 = vmatmul.mubr.f32.gmra.mrb[0].mxu0 %v370
      %v765 = vpop.f32.mrb[0].mxu0
      %v766 = vadd.f32 %v267, %v765
      %v767 = vpop.f32.mrb[0].mxu0
      %768 = vmatprep.mubr.f32.mxu0 0.0
      %769 = vmatmul.mubr.f32.gmra.mrb[0].mxu0 %v373
      %v770 = vpop.f32.mrb[0].mxu0
      %v771 = vadd.f32 %v267, %v770
      %v772 = vpop.f32.mrb[0].mxu0
      %773 = vmatprep.mubr.f32.mxu0 0.0
      %774 = vmatmul.mubr.f32.gmra.mrb[0].mxu0 %v376
      %v775 = vpop.f32.mrb[0].mxu0
      %v776 = vadd.f32 %v267, %v775
      %v777 = vpop.f32.mrb[0].mxu0
      %778 = vmatprep.mubr.f32.mxu0 0.0
      %779 = vmatmul.mubr.f32.gmra.mrb[0].mxu0 %v379
      %v780 = vpop.f32.mrb[0].mxu0
      %v781 = vadd.f32 %v267, %v780
      %v782 = vpop.f32.mrb[0].mxu0
      %783 = vmatprep.mubr.f32.mxu0 0.0
      %784 = vmatmul.mubr.f32.gmra.mrb[0].mxu0 %v382
      %v785 = vpop.f32.mrb[0].mxu0
      %v786 = vadd.f32 %v267, %v785
      %v787 = vpop.f32.mrb[0].mxu0
      %788 = vmatprep.mubr.f32.mxu0 0.0
      %789 = vmatmul.mubr.f32.gmra.mrb[0].mxu0 %v385
      %v790 = vpop.f32.mrb[0].mxu0
      %v791 = vadd.f32 %v267, %v790
      %v792 = vpop.f32.mrb[0].mxu0
      %793 = vmatprep.mubr.f32.mxu0 0.0
      %794 = vmatmul.mubr.f32.gmra.mrb[0].mxu0 %v388
      %v795 = vpop.f32.mrb[0].mxu0
      %v796 = vadd.f32 %v267, %v795
      %v797 = vpop.f32.mrb[0].mxu0
      %798 = vmatprep.mubr.f32.mxu0 0.0
      %799 = vmatmul.mubr.f32.gmra.mrb[0].mxu0 %v391
      %v800 = vpop.f32.mrb[0].mxu0
      %v801 = vadd.f32 %v267, %v800
      %v802 = vpop.f32.mrb[0].mxu0
      %803 = vmatprep.mubr.f32.mxu0 0.0
      %804 = vmatmul.mubr.f32.gmra.mrb[0].mxu0 %v394
      %v805 = vpop.f32.mrb[0].mxu0
      %v806 = vadd.f32 %v267, %v805
      %v807 = vpop.f32.mrb[0].mxu0
      %808 = vmatprep.mubr.f32.mxu0 0.0
      %809 = vmatmul.mubr.f32.gmra.mrb[0].mxu0 %v397
      %v810 = vpop.f32.mrb[0].mxu0
      %v811 = vadd.f32 %v267, %v810
      %v812 = vpop.f32.mrb[0].mxu0
      %813 = vmatprep.mubr.f32.mxu0 0.0
      %814 = vmatmul.mubr.f32.gmra.mrb[0].mxu0 %v400
      %v815 = vpop.f32.mrb[0].mxu0
      %v816 = vadd.f32 %v267, %v815
      %v817 = vpop.f32.mrb[0].mxu0
      %818 = vmatprep.mubr.f32.mxu0 0.0
      %819 = vmatmul.mubr.f32.gmra.mrb[0].mxu0 %v403
      %v820 = vpop.f32.mrb[0].mxu0
      %v821 = vadd.f32 %v267, %v820
      %v822 = vpop.f32.mrb[0].mxu0
      %823 = vmatprep.mubr.f32.mxu0 0.0
      %824 = vmatmul.mubr.f32.gmra.mrb[0].mxu0 %v406
      %v825 = vpop.f32.mrb[0].mxu0
      %v826 = vadd.f32 %v267, %v825
      %v827 = vpop.f32.mrb[0].mxu0
      %828 = vmatprep.mubr.f32.mxu0 0.0
      %829 = vmatmul.mubr.f32.gmra.mrb[0].mxu0 %v409
      %v830 = vpop.f32.mrb[0].mxu0
      %v831 = vadd.f32 %v267, %v830
      %v832 = vpop.f32.mrb[0].mxu0
      %833 = vmatprep.mubr.f32.mxu0 0.0
      %834 = vmatmul.mubr.f32.gmra.mrb[0].mxu0 %v412
      %v835 = vpop.f32.mrb[0].mxu0
      %v836 = vadd.f32 %v267, %v835
      %v837 = vpop.f32.mrb[0].mxu0
      %838 = vmatprep.mubr.f32.mxu0 0.0
      %839 = vmatmul.mubr.f32.gmra.mrb[0].mxu0 %v415
      %v840 = vpop.f32.mrb[0].mxu0
      %v841 = vadd.f32 %v267, %v840
      %v842 = vpop.f32.mrb[0].mxu0
      %843 = vmatprep.mubr.f32.mxu0 0.0
      %844 = vmatmul.mubr.f32.gmra.mrb[0].mxu0 %v418
      %v845 = vpop.f32.mrb[0].mxu0
      %v846 = vadd.f32 %v267, %v845
      %v847 = vpop.f32.mrb[0].mxu0
      %848 = vmatprep.mubr.f32.mxu0 0.0
      %849 = vmatmul.mubr.f32.gmra.mrb[0].mxu0 %v421
      %v850 = vpop.f32.mrb[0].mxu0
      %v851 = vadd.f32 %v267, %v850
      %v852 = vpop.f32.mrb[0].mxu0
      %853 = vmatprep.mubr.f32.mxu0 0.0
      %854 = vmatmul.mubr.f32.gmra.mrb[0].mxu0 %v424
      %v855 = vpop.f32.mrb[0].mxu0
      %v856 = vadd.f32 %v267, %v855
      %v857 = vpop.f32.mrb[0].mxu0
      %858 = vmatprep.mubr.f32.mxu0 0.0
      %859 = vmatmul.mubr.f32.gmra.mrb[0].mxu0 %v427
      %v860 = vpop.f32.mrb[0].mxu0
      %v861 = vadd.f32 %v267, %v860
      %v862 = vpop.f32.mrb[0].mxu0
      %863 = vmatprep.mubr.f32.mxu0 0.0
      %864 = vmatmul.mubr.f32.gmra.mrb[0].mxu0 %v430
      %v865 = vpop.f32.mrb[0].mxu0
      %v866 = vadd.f32 %v267, %v865
      %v867 = vpop.f32.mrb[0].mxu0
      %868 = vmatprep.mubr.f32.mxu0 0.0
      %869 = vmatmul.mubr.f32.gmra.mrb[0].mxu0 %v433
      %v870 = vpop.f32.mrb[0].mxu0
      %v871 = vadd.f32 %v267, %v870
      %v872 = vpop.f32.mrb[0].mxu0
      %873 = vmatprep.mubr.f32.mxu0 0.0
      %874 = vmatmul.mubr.f32.gmra.mrb[0].mxu0 %v436
      %v875 = vpop.f32.mrb[0].mxu0
      %v876 = vadd.f32 %v267, %v875
      %v877 = vpop.f32.mrb[0].mxu0
      %878 = vmatprep.mubr.f32.mxu0 0.0
      %879 = vmatmul.mubr.f32.gmra.mrb[0].mxu0 %v439
      %v880 = vpop.f32.mrb[0].mxu0
      %v881 = vadd.f32 %v267, %v880
      %v882 = vpop.f32.mrb[0].mxu0
      %883 = vmatprep.mubr.f32.mxu0 0.0
      %884 = vmatmul.mubr.f32.gmra.mrb[0].mxu0 %v442
      %v885 = vpop.f32.mrb[0].mxu0
      %v886 = vadd.f32 %v267, %v885
      %v887 = vpop.f32.mrb[0].mxu0
      %888 = vmatprep.mubr.f32.mxu0 0.0
      %889 = vmatmul.mubr.f32.gmra.mrb[0].mxu0 %v445
      %v890 = vpop.f32.mrb[0].mxu0
      %v891 = vadd.f32 %v267, %v890
      %v892 = vpop.f32.mrb[0].mxu0
      %893 = vmatprep.mubr.f32.mxu0 0.0
      %894 = vmatmul.mubr.f32.gmra.mrb[0].mxu0 %v448
      %v895 = vpop.f32.mrb[0].mxu0
      %v896 = vadd.f32 %v267, %v895
      %v897 = vpop.f32.mrb[0].mxu0
      %898 = vmatprep.mubr.f32.mxu0 0.0
      %899 = vmatmul.mubr.f32.gmra.mrb[0].mxu0 %v451
      %v900 = vpop.f32.mrb[0].mxu0
      %v901 = vadd.f32 %v267, %v900
      %v902 = vpop.f32.mrb[0].mxu0
      %903 = vmatprep.mubr.f32.mxu0 0.0
      %904 = vmatmul.mubr.f32.gmra.mrb[0].mxu0 %v454
      %v905 = vpop.f32.mrb[0].mxu0
      %v906 = vadd.f32 %v267, %v905
      %v907 = vpop.f32.mrb[0].mxu0
      %908 = vmatprep.mubr.f32.mxu0 0.0
      %909 = vmatmul.mubr.f32.gmra.mrb[0].mxu0 %v457
      %v910 = vpop.f32.mrb[0].mxu0
      %v911 = vadd.f32 %v267, %v910
      %v912 = vpop.f32.mrb[0].mxu0
      %913 = vmatprep.mubr.f32.mxu0 0.0
      %914 = vmatmul.mubr.f32.gmra.mrb[0].mxu0 %v460
      %v915 = vpop.f32.mrb[0].mxu0
      %v916 = vadd.f32 %v267, %v915
      %v917 = vpop.f32.mrb[0].mxu0
      %918 = vmatprep.mubr.f32.mxu0 0.0
      %919 = vmatmul.mubr.f32.gmra.mrb[0].mxu0 %v463
      %v920 = vpop.f32.mrb[0].mxu0
      %v921 = vadd.f32 %v267, %v920
      %v922 = vpop.f32.mrb[0].mxu0
      %923 = vmatprep.mubr.f32.mxu0 0.0
      %924 = vmatmul.mubr.f32.gmra.mrb[0].mxu0 %v466
      %v925 = vpop.f32.mrb[0].mxu0
      %v926 = vadd.f32 %v267, %v925
      %v927 = vpop.f32.mrb[0].mxu0
      %928 = vmatprep.mubr.f32.mxu0 0.0
      %929 = vmatmul.mubr.f32.gmra.mrb[0].mxu0 %v469
      %v930 = vpop.f32.mrb[0].mxu0
      %v931 = vadd.f32 %v267, %v930
      %v932 = vpop.f32.mrb[0].mxu0
      %933 = vmatprep.mubr.f32.mxu0 0.0
      %934 = vmatmul.mubr.f32.gmra.mrb[0].mxu0 %v472
      %v935 = vpop.f32.mrb[0].mxu0
      %v936 = vadd.f32 %v267, %v935
      %v937 = vpop.f32.mrb[0].mxu0
      %938 = vmatprep.mubr.f32.mxu0 0.0
      %939 = vmatmul.mubr.f32.gmra.mrb[0].mxu0 %v475
      %v940 = vpop.f32.mrb[0].mxu0
      %v941 = vadd.f32 %v267, %v940
      %v942 = vpop.f32.mrb[0].mxu0
      %943 = vmatprep.mubr.f32.mxu0 0.0
      %944 = vmatmul.mubr.f32.gmra.mrb[0].mxu0 %v478
      %v945 = vpop.f32.mrb[0].mxu0
      %v946 = vadd.f32 %v267, %v945
      %v947 = vpop.f32.mrb[0].mxu0
      %948 = vmatprep.mubr.f32.mxu0 0.0
      %949 = vmatmul.mubr.f32.gmra.mrb[0].mxu0 %v481
      %v950 = vpop.f32.mrb[0].mxu0
      %v951 = vadd.f32 %v267, %v950
      %v952 = vpop.f32.mrb[0].mxu0
      %953 = vmatprep.mubr.f32.mxu0 0.0
      %954 = vmatmul.mubr.f32.gmra.mrb[0].mxu0 %v484
      %v955 = vpop.f32.mrb[0].mxu0
      %v956 = vadd.f32 %v267, %v955
      %v957 = vpop.f32.mrb[0].mxu0
      %958 = vdwg.mxu0
      %v959 = vmax.f32 %v601, 0.0
      %v960 = vmax.f32 %v606, 0.0
      %v961 = vmax.f32 %v611, 0.0
      %v962 = vmax.f32 %v616, 0.0
      %v963 = vmax.f32 %v621, 0.0
      %v964 = vmax.f32 %v626, 0.0
      %v965 = vmax.f32 %v631, 0.0
      %v966 = vmax.f32 %v636, 0.0
      %v967 = vmax.f32 %v641, 0.0
      %v968 = vmax.f32 %v646, 0.0
      %v969 = vmax.f32 %v651, 0.0
      %v970 = vmax.f32 %v656, 0.0
      %v971 = vmax.f32 %v661, 0.0
      %v972 = vmax.f32 %v666, 0.0
      %v973 = vmax.f32 %v671, 0.0
      %v974 = vmax.f32 %v676, 0.0
      %v975 = vmax.f32 %v681, 0.0
      %v976 = vmax.f32 %v686, 0.0
      %v977 = vmax.f32 %v691, 0.0
      %v978 = vmax.f32 %v696, 0.0
      %v979 = vmax.f32 %v701, 0.0
      %v980 = vmax.f32 %v706, 0.0
      %v981 = vmax.f32 %v711, 0.0
      %v982 = vmax.f32 %v716, 0.0
      %v983 = vmax.f32 %v721, 0.0
      %v984 = vmax.f32 %v726, 0.0
      %v985 = vmax.f32 %v731, 0.0
      %v986 = vmax.f32 %v736, 0.0
      %v987 = vmax.f32 %v741, 0.0
      %v988 = vmax.f32 %v746, 0.0
      %v989 = vmax.f32 %v751, 0.0
      %v990 = vmax.f32 %v756, 0.0
      %v991 = vmax.f32 %v761, 0.0
      %v992 = vmax.f32 %v766, 0.0
      %v993 = vmax.f32 %v771, 0.0
      %v994 = vmax.f32 %v776, 0.0
      %v995 = vmax.f32 %v781, 0.0
      %v996 = vmax.f32 %v786, 0.0
      %v997 = vmax.f32 %v791, 0.0
      %v998 = vmax.f32 %v796, 0.0
      %v999 = vmax.f32 %v801, 0.0
      %v1000 = vmax.f32 %v806, 0.0
      %v1001 = vmax.f32 %v811, 0.0
      %v1002 = vmax.f32 %v816, 0.0
      %v1003 = vmax.f32 %v821, 0.0
      %v1004 = vmax.f32 %v826, 0.0
      %v1005 = vmax.f32 %v831, 0.0
      %v1006 = vmax.f32 %v836, 0.0
      %v1007 = vmax.f32 %v841, 0.0
      %v1008 = vmax.f32 %v846, 0.0
      %v1009 = vmax.f32 %v851, 0.0
      %v1010 = vmax.f32 %v856, 0.0
      %v1011 = vmax.f32 %v861, 0.0
      %v1012 = vmax.f32 %v866, 0.0
      %v1013 = vmax.f32 %v871, 0.0
      %v1014 = vmax.f32 %v876, 0.0
      %v1015 = vmax.f32 %v881, 0.0
      %v1016 = vmax.f32 %v886, 0.0
      %v1017 = vmax.f32 %v891, 0.0
      %v1018 = vmax.f32 %v896, 0.0
      %v1019 = vmax.f32 %v901, 0.0
      %v1020 = vmax.f32 %v906, 0.0
      %v1021 = vmax.f32 %v911, 0.0
      %v1022 = vmax.f32 %v916, 0.0
      %v1023 = vmax.f32 %v921, 0.0
      %v1024 = vmax.f32 %v926, 0.0
      %v1025 = vmax.f32 %v931, 0.0
      %v1026 = vmax.f32 %v936, 0.0
      %v1027 = vmax.f32 %v941, 0.0
      %v1028 = vmax.f32 %v946, 0.0
      %v1029 = vmax.f32 %v951, 0.0
      %v1030 = vmax.f32 %v956, 0.0
      %v1031 = vmax.f32 %v959, %v977
      %v1032 = vmax.f32 %v960, %v978
      %v1033 = vmax.f32 %v961, %v979
      %v1034 = vmax.f32 %v962, %v980
      %v1035 = vmax.f32 %v963, %v981
      %v1036 = vmax.f32 %v964, %v982
      %v1037 = vmax.f32 %v965, %v983
      %v1038 = vmax.f32 %v966, %v984
      %v1039 = vmax.f32 %v967, %v985
      %v1040 = vmax.f32 %v968, %v986
      %v1041 = vmax.f32 %v969, %v987
      %v1042 = vmax.f32 %v970, %v988
      %v1043 = vmax.f32 %v971, %v989
      %v1044 = vmax.f32 %v972, %v990
      %v1045 = vmax.f32 %v973, %v991
      %v1046 = vmax.f32 %v974, %v992
      %v1047 = vmax.f32 %v975, %v993
      %v1048 = vmax.f32 %v976, %v994
      %v1049 = vmax.f32 %v995, %v1013
      %v1050 = vmax.f32 %v996, %v1014
      %v1051 = vmax.f32 %v997, %v1015
      %v1052 = vmax.f32 %v998, %v1016
      %v1053 = vmax.f32 %v999, %v1017
      %v1054 = vmax.f32 %v1000, %v1018
      %v1055 = vmax.f32 %v1001, %v1019
      %v1056 = vmax.f32 %v1002, %v1020
      %v1057 = vmax.f32 %v1003, %v1021
      %v1058 = vmax.f32 %v1004, %v1022
      %v1059 = vmax.f32 %v1005, %v1023
      %v1060 = vmax.f32 %v1006, %v1024
      %v1061 = vmax.f32 %v1007, %v1025
      %v1062 = vmax.f32 %v1008, %v1026
      %v1063 = vmax.f32 %v1009, %v1027
      %v1064 = vmax.f32 %v1010, %v1028
      %v1065 = vmax.f32 %v1011, %v1029
      %v1066 = vmax.f32 %v1012, %v1030
      %v1067 = vmax.f32 %v1031, %v1049
      %v1068 = vmax.f32 %v1032, %v1050
      %v1069 = vmax.f32 %v1033, %v1051
      %v1070 = vmax.f32 %v1034, %v1052
      %v1071 = vmax.f32 %v1035, %v1053
      %v1072 = vmax.f32 %v1036, %v1054
      %v1073 = vmax.f32 %v1037, %v1055
      %v1074 = vmax.f32 %v1038, %v1056
      %v1075 = vmax.f32 %v1039, %v1057
      %v1076 = vmax.f32 %v1040, %v1058
      %v1077 = vmax.f32 %v1041, %v1059
      %v1078 = vmax.f32 %v1042, %v1060
      %v1079 = vmax.f32 %v1043, %v1061
      %v1080 = vmax.f32 %v1044, %v1062
      %v1081 = vmax.f32 %v1045, %v1063
      %v1082 = vmax.f32 %v1046, %v1064
      %v1083 = vmax.f32 %v1047, %v1065
      %v1084 = vmax.f32 %v1048, %v1066
      %1085 = vst [vmem:[%s172] sm:$0xff] %v1067
      %1086 = vst [vmem:[%s172 + $0x8] sm:$0xff] %v1068
      %1087 = vst [vmem:[%s172 + $0x10] sm:$0xff] %v1069
      %1088 = vst [vmem:[%s172 + $0x18] sm:$0xff] %v1070
      %1089 = vst [vmem:[%s172 + $0x20] sm:$0xff] %v1071
      %1090 = vst [vmem:[%s172 + $0x28] sm:$0xff] %v1072
      %1091 = vst [vmem:[%s172 + $0x30] sm:$0xff] %v1073
      %1092 = vst [vmem:[%s172 + $0x38] sm:$0xff] %v1074
      %1093 = vst [vmem:[%s172 + $0x40] sm:$0xff] %v1075
      %1094 = vst [vmem:[%s172 + $0x48] sm:$0xff] %v1076
      %1095 = vst [vmem:[%s172 + $0x50] sm:$0xff] %v1077
      %1096 = vst [vmem:[%s172 + $0x58] sm:$0xff] %v1078
      %1097 = vst [vmem:[%s172 + $0x60] sm:$0xff] %v1079
      %1098 = vst [vmem:[%s172 + $0x68] sm:$0xff] %v1080
      %1099 = vst [vmem:[%s172 + $0x70] sm:$0xff] %v1081
      %1100 = vst [vmem:[%s172 + $0x78] sm:$0xff] %v1082
      %1101 = vst [vmem:[%s172 + $0x80] sm:$0xff] %v1083
      %1102 = vst [vmem:[%s172 + $0x88] sm:$0xff] %v1084
      %s1103 = smul.u32 18, %s14
      %p1104 = scmp.lt.s32.totalorder %s1103, 35
      %s1105 = scalar_select %p1104, %s1103, 35
      %s1106 = smul.addr %s1105, 8
      %s1107 = scalar_lea.vmem %s3, %s1106
      // Predicated region
      $region33: #{net_forward.3} parent=31 // pred_check
        %p1108 = pneg %p100
      $region34: #{net_forward.3} parent=31 // pred_check_branch
        %1110 = sbr.rel (%p1108) target = $region36
      $region35: #{net_forward.3} parent=31 // pred_region
        %s1111 = smul.u32 18, %s14
      $region36: #{net_forward.3} parent=31 // pred_fallthru
        _
    $region32: #{net_forward.3} parent=5 // pred_fallthru
      _
    %p1112 = scmp.le.s32.totalorder 2, %s9
    // Predicated region
    $region37: #{net_forward.3} parent=5 // pred_check
      %p1113 = pneg %p1112
    $region38: #{net_forward.3} parent=5 // pred_check_branch
      %1115 = sbr.rel (%p1113) target = $region40
    $region39: #{net_forward.3} parent=5 // pred_region
      %s1116 = ssub.s32 %s9, 2
      // Predicated region
      $region41: #{net_forward.3} parent=39 // pred_check
        %p1117 = pneg %p106
      $region42: #{net_forward.3} parent=39 // pred_check_branch
        %1119 = sbr.rel (%p1117) target = $region44
      $region43: #{net_forward.3} parent=39 // pred_region
        %s1120 = smul.u32 18, %s15
        %p1121 = scmp.lt.s32.totalorder %s1120, 35
        %s1122 = scalar_select %p1121, %s1120, 35
        %s1123 = smul.addr %s1122, 8
        %s1124 = scalar_lea.vmem %s3, %s1123
      $region44: #{net_forward.3} parent=39 // pred_fallthru
        _
    $region40: #{net_forward.3} parent=5 // pred_fallthru
      _
  $region6: #{net_forward.3} parent=0 // loop_footer
    %s13 = sadd.s32 1, %s9
  $region7: #{net_forward.3} parent=0 // loop_footer_branch
    %8 = sbr.rel target = $region3
  $region8: #{net_forward.3} parent=0 // loop_exit
    _

// kernel: net_forward.4
$region0: #{net_forward.4}
  #allocation0 [shape = 'u32[]', space=smem, size = 0x4, offset = 0x4, fixed_abs, tag = 'smem constant byte address 0x4 - core index']
  #allocation1 [shape = 'u32[144,128]{1,0:T(1,128)}', space=vmem, size = 0x12000, scoped, tag = 'internal scratch']
  %s0 = inlined_call_operand.vmem [shape: f32[128,150], index: 0, kind: input, shape index: {}]
  %s1 = inlined_call_operand.vmem [shape: f32[128,150], index: 1, kind: input, shape index: {}]
  %s2 = inlined_call_operand.vmem [shape: f32[1,128], index: 2, kind: input, shape index: {}]
  %s3 = inlined_call_operand.vmem [shape: f32[32,128], index: 3, kind: output, shape index: {}]
  %s4 = sld [smem:[#allocation0]]
  $region45: #{net_forward.4} parent=0
    _
  %s6 = ssub.s32 1, %s4
  %s7 = scalar_select 0, %s6, %s4
  loop: start=0, step=1, limit=4
  $region2: #{net_forward.4} parent=0 // loop_pre_header
    _
  $region3: #{net_forward.4} parent=0 // loop_header
    %s9 = sphi 0, %s13
    %p10 = scmp.ge.s32.totalorder %s9, 4
    %s19 = sphi 0, %s21
    %s22 = sphi 0, %s19
    %s23 = sphi 0, %s22
    %s39 = sphi 0, %s23
    %s43 = sphi 0, %s43
    %s45 = sphi 0, %s43
    %s46 = sphi 0, %s45
    %s60 = sphi 0, %s46
    %s64 = sphi 0, %s64
    %s66 = sphi 0, %s64
    %s67 = sphi 0, %s66
    %s81 = sphi 0, %s67
    %s87 = sphi 0, %s89
    %s90 = sphi 0, %s87
    %s91 = sphi 0, %s90
    %s107 = sphi 0, %s91
  $region4: #{net_forward.4} parent=0 // loop_header_branch
    %12 = sbr.rel (%p10) target = $region8
  $region5: #{net_forward.4} parent=0 // loop_body
    %s14 = ssub.s32 %s9, 1
    %s15 = ssub.s32 %s9, 2
    %s16 = sadd.s32 %s9, 1
    %s17 = ssub.s32 %s9, %s16
    %p18 = scmp.eq.s32.totalorder %s17, 0
    %s20 = sadd.s32 %s19, 1
    %s21 = scalar_select %p18, %s19, %s20
    %p24 = pneg %p18
    %p25 = scmp.eq.s32.totalorder %s9, 1
    %p26 = por %p24, %p25
    %p27 = scmp.ne.s32.totalorder %s19, %s22
    %p28 = scmp.eq.s32.totalorder %s9, 0
    %p29 = por %p27, %p28
    %p30 = scmp.ne.s32.totalorder %s19, %s22
    %p31 = scmp.eq.s32.totalorder %s14, 1
    %p32 = por %p30, %p31
    %p33 = scmp.ne.s32.totalorder %s22, %s23
    %p34 = scmp.eq.s32.totalorder %s14, 0
    %p35 = por %p33, %p34
    %p36 = scmp.ne.s32.totalorder %s22, %s23
    %p37 = scmp.eq.s32.totalorder %s15, 1
    %p38 = por %p36, %p37
    %p40 = scmp.ne.s32.totalorder %s23, %s39
    %p41 = scmp.eq.s32.totalorder %s15, 0
    %p42 = por %p40, %p41
    %s44 = sadd.s32 %s43, 1
    %p47 = scmp.eq.s32.totalorder %s9, 1
    %p48 = scmp.ne.s32.totalorder %s43, %s45
    %p49 = scmp.eq.s32.totalorder %s9, 0
    %p50 = por %p48, %p49
    %p51 = scmp.ne.s32.totalorder %s43, %s45
    %p52 = scmp.eq.s32.totalorder %s14, 1
    %p53 = por %p51, %p52
    %p54 = scmp.ne.s32.totalorder %s45, %s46
    %p55 = scmp.eq.s32.totalorder %s14, 0
    %p56 = por %p54, %p55
    %p57 = scmp.ne.s32.totalorder %s45, %s46
    %p58 = scmp.eq.s32.totalorder %s15, 1
    %p59 = por %p57, %p58
    %p61 = scmp.ne.s32.totalorder %s46, %s60
    %p62 = scmp.eq.s32.totalorder %s15, 0
    %p63 = por %p61, %p62
    %s65 = sadd.s32 %s64, 1
    %p68 = scmp.eq.s32.totalorder %s9, 1
    %p69 = scmp.ne.s32.totalorder %s64, %s66
    %p70 = scmp.eq.s32.totalorder %s9, 0
    %p71 = por %p69, %p70
    %p72 = scmp.ne.s32.totalorder %s64, %s66
    %p73 = scmp.eq.s32.totalorder %s14, 1
    %p74 = por %p72, %p73
    %p75 = scmp.ne.s32.totalorder %s66, %s67
    %p76 = scmp.eq.s32.totalorder %s14, 0
    %p77 = por %p75, %p76
    %p78 = scmp.ne.s32.totalorder %s66, %s67
    %p79 = scmp.eq.s32.totalorder %s15, 1
    %p80 = por %p78, %p79
    %p82 = scmp.ne.s32.totalorder %s67, %s81
    %p83 = scmp.eq.s32.totalorder %s15, 0
    %p84 = por %p82, %p83
    %s85 = ssub.s32 %s9, %s16
    %p86 = scmp.eq.s32.totalorder %s85, 0
    %s88 = sadd.s32 %s87, 1
    %s89 = scalar_select %p86, %s87, %s88
    %p92 = pneg %p86
    %p93 = scmp.eq.s32.totalorder %s9, 1
    %p94 = por %p92, %p93
    %p95 = scmp.ne.s32.totalorder %s87, %s90
    %p96 = scmp.eq.s32.totalorder %s9, 0
    %p97 = por %p95, %p96
    %p98 = scmp.ne.s32.totalorder %s87, %s90
    %p99 = scmp.eq.s32.totalorder %s14, 1
    %p100 = por %p98, %p99
    %p101 = scmp.ne.s32.totalorder %s90, %s91
    %p102 = scmp.eq.s32.totalorder %s14, 0
    %p103 = por %p101, %p102
    %p104 = scmp.ne.s32.totalorder %s90, %s91
    %p105 = scmp.eq.s32.totalorder %s15, 1
    %p106 = por %p104, %p105
    %p108 = scmp.ne.s32.totalorder %s91, %s107
    %p109 = scmp.eq.s32.totalorder %s15, 0
    %p110 = por %p108, %p109
    %p111 = scmp.le.s32.totalorder 1, %s9
    %p112 = scmp.lt.s32.totalorder %s9, 3
    %p113 = pnand %p111, %p112
    %p114 = pneg %p113
    // Predicated region
    $region9: #{net_forward.4} parent=5 // pred_check
      _
    $region10: #{net_forward.4} parent=5 // pred_check_branch
      %116 = sbr.rel (%p113) target = $region12
    $region11: #{net_forward.4} parent=5 // pred_region
      %s117 = ssub.s32 %s9, 1
      // Predicated region
      $region13: #{net_forward.4} parent=11 // pred_check
        %p118 = pneg %p56
      $region14: #{net_forward.4} parent=11 // pred_check_branch
        %120 = sbr.rel (%p118) target = $region16
      $region15: #{net_forward.4} parent=11 // pred_region
        _
      $region16: #{net_forward.4} parent=11 // pred_fallthru
        _
      // Predicated region
      $region17: #{net_forward.4} parent=11 // pred_check
        %p121 = pneg %p77
      $region18: #{net_forward.4} parent=11 // pred_check_branch
        %123 = sbr.rel (%p121) target = $region20
      $region19: #{net_forward.4} parent=11 // pred_region
        _
      $region20: #{net_forward.4} parent=11 // pred_fallthru
        _
    $region12: #{net_forward.4} parent=5 // pred_fallthru
      _
    %p124 = scmp.lt.s32.totalorder %s9, 2
    // Predicated region
    $region21: #{net_forward.4} parent=5 // pred_check
      %p125 = pneg %p124
    $region22: #{net_forward.4} parent=5 // pred_check_branch
      %127 = sbr.rel (%p125) target = $region24
    $region23: #{net_forward.4} parent=5 // pred_region
      // Predicated region
      $region25: #{net_forward.4} parent=23 // pred_check
        %p128 = pneg %p29
      $region26: #{net_forward.4} parent=23 // pred_check_branch
        %130 = sbr.rel (%p128) target = $region28
      $region27: #{net_forward.4} parent=23 // pred_region
        %s131 = smul.u32 8, %s9
        %p132 = scmp.lt.s32.totalorder %s131, 15
        %s133 = scalar_select %p132, %s131, 15
        %s134 = smul.addr %s133, 2
        %s135 = smul.addr %s134, 8
        %s136 = scalar_lea.vmem %s0, %s135
        %s137 = smul.u32 8, %s9
      $region28: #{net_forward.4} parent=23 // pred_fallthru
        _
    $region24: #{net_forward.4} parent=5 // pred_fallthru
      _
    %p138 = scmp.le.s32.totalorder 1, %s9
    %p139 = scmp.lt.s32.totalorder %s9, 3
    %p140 = pnand %p138, %p139
    %p141 = pneg %p140
    // Predicated region
    $region29: #{net_forward.4} parent=5 // pred_check
      _
    $region30: #{net_forward.4} parent=5 // pred_check_branch
      %143 = sbr.rel (%p140) target = $region32
    $region31: #{net_forward.4} parent=5 // pred_region
      %s144 = ssub.s32 %s9, 1
      %s145 = smul.u32 8, %s14
      %p146 = scmp.lt.s32.totalorder %s145, 15
      %s147 = scalar_select %p146, %s145, 15
      %s148 = smul.addr %s147, 2
      %s149 = smul.addr %s148, 8
      %s150 = scalar_lea.vmem %s0, %s149
      %p151 = pneg %p35
      %p152 = pneg %p32
      %p153 = pneg %p56
      %p154 = pneg %p53
      %p155 = pneg %p77
      %p156 = pneg %p74
      %p157 = pneg %p103
      %p158 = pneg %p100
      %s159 = smul.u32 2, %s14
      %p160 = scmp.lt.s32.totalorder %s159, 3
      %s161 = scalar_select %p160, %s159, 3
      %s162 = smul.addr %s161, 8
      %s163 = scalar_lea.vmem %s3, %s162
      %s164 = smul.u32 8, %s14
      %p165 = scmp.lt.s32.totalorder %s164, 15
      %s166 = scalar_select %p165, %s164, 15
      %s167 = smul.addr %s166, 2
      %s168 = smul.addr %s167, 8
      %s169 = scalar_lea.vmem %s0, %s168
      %s170 = smul.u32 8, %s14
      %s171 = smul.u32 2, %s14
      %p172 = scmp.lt.s32.totalorder %s171, 3
      %s173 = scalar_select %p172, %s171, 3
      %s174 = smul.addr %s173, 8
      %s175 = scalar_lea.vmem %s3, %s174
      %s176 = smul.u32 2, %s14
      %v177 = vld [vmem:[%s169] sm:$0xff]
      %v178 = vld [vmem:[%s169 + $0x8] sm:$0xff]
      %v179 = vld [vmem:[%s169 + $0x10] sm:$0xff]
      %v180 = vld [vmem:[%s169 + $0x18] sm:$0xff]
      %v181 = vld [vmem:[%s169 + $0x20] sm:$0xff]
      %v182 = vld [vmem:[%s169 + $0x28] sm:$0xff]
      %v183 = vld [vmem:[%s169 + $0x30] sm:$0xff]
      %v184 = vld [vmem:[%s169 + $0x38] sm:$0xff]
      %v185 = vld [vmem:[%s169 + $0x40] sm:$0xff]
      %v186 = vld [vmem:[%s169 + $0x48] sm:$0xff]
      %v187 = vld [vmem:[%s169 + $0x50] sm:$0xff]
      %v188 = vld [vmem:[%s169 + $0x58] sm:$0xff]
      %v189 = vld [vmem:[%s169 + $0x60] sm:$0xff]
      %v190 = vld [vmem:[%s169 + $0x68] sm:$0xff]
      %v191 = vld [vmem:[%s169 + $0x70] sm:$0xff]
      %v192 = vld [vmem:[%s169 + $0x78] sm:$0xff]
      %v193 = vld [vmem:[%s1] sm:$0xff]
      %v194 = vld [vmem:[%s1 + $0x8] sm:$0xff]
      %v195 = vld [vmem:[%s1 + $0x10] sm:$0xff]
      %v196 = vld [vmem:[%s1 + $0x18] sm:$0xff]
      %v197 = vld [vmem:[%s1 + $0x20] sm:$0xff]
      %v198 = vld [vmem:[%s1 + $0x28] sm:$0xff]
      %v199 = vld [vmem:[%s1 + $0x30] sm:$0xff]
      %v200 = vld [vmem:[%s1 + $0x38] sm:$0xff]
      %v201 = vld [vmem:[%s1 + $0x40] sm:$0xff]
      %v202 = vld [vmem:[%s1 + $0x48] sm:$0xff]
      %v203 = vld [vmem:[%s1 + $0x50] sm:$0xff]
      %v204 = vld [vmem:[%s1 + $0x58] sm:$0xff]
      %v205 = vld [vmem:[%s1 + $0x60] sm:$0xff]
      %v206 = vld [vmem:[%s1 + $0x68] sm:$0xff]
      %v207 = vld [vmem:[%s1 + $0x70] sm:$0xff]
      %v208 = vld [vmem:[%s1 + $0x78] sm:$0xff]
      %v209 = vld [vmem:[%s1 + $0x80] sm:$0xff]
      %v210 = vld [vmem:[%s1 + $0x88] sm:$0xff]
      %v211 = vld [vmem:[%s1 + $0x90] sm:$0xff]
      %v212 = vld [vmem:[%s1 + $0x98] sm:$0xff]
      %v213 = vld [vmem:[%s1 + $0xa0] sm:$0xff]
      %v214 = vld [vmem:[%s1 + $0xa8] sm:$0xff]
      %v215 = vld [vmem:[%s1 + $0xb0] sm:$0xff]
      %v216 = vld [vmem:[%s1 + $0xb8] sm:$0xff]
      %v217 = vld [vmem:[%s1 + $0xc0] sm:$0xff]
      %v218 = vld [vmem:[%s1 + $0xc8] sm:$0xff]
      %v219 = vld [vmem:[%s1 + $0xd0] sm:$0xff]
      %v220 = vld [vmem:[%s1 + $0xd8] sm:$0xff]
      %v221 = vld [vmem:[%s1 + $0xe0] sm:$0xff]
      %v222 = vld [vmem:[%s1 + $0xe8] sm:$0xff]
      %v223 = vld [vmem:[%s1 + $0xf0] sm:$0xff]
      %v224 = vld [vmem:[%s1 + $0xf8] sm:$0xff]
      %v225 = vld [vmem:[%s2] sm:$0x1]
      %v227 = vlaneseq
      %v228 = vshrl.u32 %v227, 7
      %v229 = vsub.s32 0, %v228
      %v230 = vrot.slane %v225, %v229
      %vm232 = vcmask 179200
      %v234 = vsel %vm232, %v178, 0
      %v237 = vsel %vm232, %v180, 0
      %v240 = vsel %vm232, %v182, 0
      %v243 = vsel %vm232, %v184, 0
      %v246 = vsel %vm232, %v186, 0
      %v249 = vsel %vm232, %v188, 0
      %v252 = vsel %vm232, %v190, 0
      %v255 = vsel %vm232, %v192, 0
      %v258 = vsel %vm232, %v194, 0
      %v261 = vsel %vm232, %v196, 0
      %v264 = vsel %vm232, %v198, 0
      %v267 = vsel %vm232, %v200, 0
      %v270 = vsel %vm232, %v202, 0
      %v273 = vsel %vm232, %v204, 0
      %v276 = vsel %vm232, %v206, 0
      %v279 = vsel %vm232, %v208, 0
      %v282 = vsel %vm232, %v210, 0
      %v285 = vsel %vm232, %v212, 0
      %v288 = vsel %vm232, %v214, 0
      %v291 = vsel %vm232, %v216, 0
      %v294 = vsel %vm232, %v218, 0
      %v297 = vsel %vm232, %v220, 0
      %v300 = vsel %vm232, %v222, 0
      %v303 = vsel %vm232, %v224, 0
      %305 = vmatprep.subr.mxu0 %v258
      %306 = vmatpush1.xpose.msra.mxu0 %v193
      %307 = vmatprep.subr.mxu0 %v261
      %308 = vmatpush1.xpose.msra.mxu0 %v195
      %309 = vmatprep.subr.mxu0 %v264
      %310 = vmatpush1.xpose.msra.mxu0 %v197
      %311 = vmatprep.subr.mxu0 %v267
      %312 = vmatpush1.xpose.msra.mxu0 %v199
      %313 = vmatprep.subr.mxu0 %v270
      %314 = vmatpush1.xpose.msra.mxu0 %v201
      %315 = vmatprep.subr.mxu0 %v273
      %316 = vmatpush1.xpose.msra.mxu0 %v203
      %317 = vmatprep.subr.mxu0 %v276
      %318 = vmatpush1.xpose.msra.mxu0 %v205
      %319 = vmatprep.subr.mxu0 %v279
      %320 = vmatpush1.xpose.msra.mxu0 %v207
      %321 = vmatprep.subr.mxu0 %v282
      %322 = vmatpush1.xpose.msra.mxu0 %v209
      %323 = vmatprep.subr.mxu0 %v285
      %324 = vmatpush1.xpose.msra.mxu0 %v211
      %325 = vmatprep.subr.mxu0 %v288
      %326 = vmatpush1.xpose.msra.mxu0 %v213
      %327 = vmatprep.subr.mxu0 %v291
      %328 = vmatpush1.xpose.msra.mxu0 %v215
      %329 = vmatprep.subr.mxu0 %v294
      %330 = vmatpush1.xpose.msra.mxu0 %v217
      %331 = vmatprep.subr.mxu0 %v297
      %332 = vmatpush1.xpose.msra.mxu0 %v219
      %333 = vmatprep.subr.mxu0 %v300
      %334 = vmatpush1.xpose.msra.mxu0 %v221
      %335 = vmatprep.subr.mxu0 %v303
      %336 = vmatpush1.xpose.msra.mxu0 %v223
      %337 = vmatprep.subr.mxu0 0.0
      %338 = vmatpush1.xpose.msra.mxu0 0.0
      %339 = vmatprep.subr.mxu0 0.0
      %340 = vmatpush1.xpose.msra.mxu0 0.0
      %341 = vmatprep.subr.mxu0 0.0
      %342 = vmatpush1.xpose.msra.mxu0 0.0
      %343 = vmatprep.subr.mxu0 0.0
      %344 = vmatpush1.xpose.msra.mxu0 0.0
      %345 = vmatprep.subr.mxu0 0.0
      %346 = vmatpush1.xpose.msra.mxu0 0.0
      %347 = vmatprep.subr.mxu0 0.0
      %348 = vmatpush1.xpose.msra.mxu0 0.0
      %349 = vmatprep.subr.mxu0 0.0
      %350 = vmatpush1.xpose.msra.mxu0 0.0
      %351 = vmatprep.subr.mxu0 0.0
      %352 = vmatpush1.xpose.msra.mxu0 0.0
      %353 = vmatprep.subr.mxu0 0.0
      %354 = vmatpush1.xpose.msra.mxu0 0.0
      %355 = vmatprep.subr.mxu0 0.0
      %356 = vmatpush1.xpose.msra.mxu0 0.0
      %357 = vmatprep.subr.mxu0 0.0
      %358 = vmatpush1.xpose.msra.mxu0 0.0
      %359 = vmatprep.subr.mxu0 0.0
      %360 = vmatpush1.xpose.msra.mxu0 0.0
      %361 = vmatprep.subr.mxu0 0.0
      %362 = vmatpush1.xpose.msra.mxu0 0.0
      %363 = vmatprep.subr.mxu0 0.0
      %364 = vmatpush1.xpose.msra.mxu0 0.0
      %365 = vmatprep.subr.mxu0 0.0
      %366 = vmatpush1.xpose.msra.mxu0 0.0
      %367 = vmatprep.subr.mxu0 0.0
      %368 = vmatpush1.xpose.msra.mxu0 0.0
      %369 = vmatprep.mubr.f32.mxu0 %v234
      %370 = vmatmul.mubr.f32.gmra.mrb[0].mxu0 %v177
      %v371 = vpop.f32.mrb[0].mxu0
      %v372 = vadd.f32 %v230, %v371
      %v373 = vpop.f32.mrb[0].mxu0
      %374 = vmatprep.mubr.f32.mxu0 %v237
      %375 = vmatmul.mubr.f32.gmra.mrb[0].mxu0 %v179
      %v376 = vpop.f32.mrb[0].mxu0
      %v377 = vadd.f32 %v230, %v376
      %v378 = vpop.f32.mrb[0].mxu0
      %379 = vmatprep.mubr.f32.mxu0 %v240
      %380 = vmatmul.mubr.f32.gmra.mrb[0].mxu0 %v181
      %v381 = vpop.f32.mrb[0].mxu0
      %v382 = vadd.f32 %v230, %v381
      %v383 = vpop.f32.mrb[0].mxu0
      %384 = vmatprep.mubr.f32.mxu0 %v243
      %385 = vmatmul.mubr.f32.gmra.mrb[0].mxu0 %v183
      %v386 = vpop.f32.mrb[0].mxu0
      %v387 = vadd.f32 %v230, %v386
      %v388 = vpop.f32.mrb[0].mxu0
      %389 = vmatprep.mubr.f32.mxu0 %v246
      %390 = vmatmul.mubr.f32.gmra.mrb[0].mxu0 %v185
      %v391 = vpop.f32.mrb[0].mxu0
      %v392 = vadd.f32 %v230, %v391
      %v393 = vpop.f32.mrb[0].mxu0
      %394 = vmatprep.mubr.f32.mxu0 %v249
      %395 = vmatmul.mubr.f32.gmra.mrb[0].mxu0 %v187
      %v396 = vpop.f32.mrb[0].mxu0
      %v397 = vadd.f32 %v230, %v396
      %v398 = vpop.f32.mrb[0].mxu0
      %399 = vmatprep.mubr.f32.mxu0 %v252
      %400 = vmatmul.mubr.f32.gmra.mrb[0].mxu0 %v189
      %v401 = vpop.f32.mrb[0].mxu0
      %v402 = vadd.f32 %v230, %v401
      %v403 = vpop.f32.mrb[0].mxu0
      %404 = vmatprep.mubr.f32.mxu0 %v255
      %405 = vmatmul.mubr.f32.gmra.mrb[0].mxu0 %v191
      %v406 = vpop.f32.mrb[0].mxu0
      %v407 = vadd.f32 %v230, %v406
      %v408 = vpop.f32.mrb[0].mxu0
      %409 = vdwg.mxu0
      %v410 = vmax.f32 %v372, 0.0
      %v411 = vmax.f32 %v377, 0.0
      %v412 = vmax.f32 %v382, 0.0
      %v413 = vmax.f32 %v387, 0.0
      %v414 = vmax.f32 %v392, 0.0
      %v415 = vmax.f32 %v397, 0.0
      %v416 = vmax.f32 %v402, 0.0
      %v417 = vmax.f32 %v407, 0.0
      %v418 = vmax.f32 %v410, %v412
      %v419 = vmax.f32 %v411, %v413
      %v420 = vmax.f32 %v414, %v416
      %v421 = vmax.f32 %v415, %v417
      %v422 = vmax.f32 %v418, %v420
      %v423 = vmax.f32 %v419, %v421
      %424 = vst [vmem:[%s175] sm:$0xff] %v422
      %425 = vst [vmem:[%s175 + $0x8] sm:$0xff] %v423
      %s426 = smul.u32 2, %s14
      %p427 = scmp.lt.s32.totalorder %s426, 3
      %s428 = scalar_select %p427, %s426, 3
      %s429 = smul.addr %s428, 8
      %s430 = scalar_lea.vmem %s3, %s429
      // Predicated region
      $region33: #{net_forward.4} parent=31 // pred_check
        %p431 = pneg %p100
      $region34: #{net_forward.4} parent=31 // pred_check_branch
        %433 = sbr.rel (%p431) target = $region36
      $region35: #{net_forward.4} parent=31 // pred_region
        %s434 = smul.u32 2, %s14
      $region36: #{net_forward.4} parent=31 // pred_fallthru
        _
    $region32: #{net_forward.4} parent=5 // pred_fallthru
      _
    %p435 = scmp.le.s32.totalorder 2, %s9
    // Predicated region
    $region37: #{net_forward.4} parent=5 // pred_check
      %p436 = pneg %p435
    $region38: #{net_forward.4} parent=5 // pred_check_branch
      %438 = sbr.rel (%p436) target = $region40
    $region39: #{net_forward.4} parent=5 // pred_region
      %s439 = ssub.s32 %s9, 2
      // Predicated region
      $region41: #{net_forward.4} parent=39 // pred_check
        %p440 = pneg %p106
      $region42: #{net_forward.4} parent=39 // pred_check_branch
        %442 = sbr.rel (%p440) target = $region44
      $region43: #{net_forward.4} parent=39 // pred_region
        %s443 = smul.u32 2, %s15
        %p444 = scmp.lt.s32.totalorder %s443, 3
        %s445 = scalar_select %p444, %s443, 3
        %s446 = smul.addr %s445, 8
        %s447 = scalar_lea.vmem %s3, %s446
      $region44: #{net_forward.4} parent=39 // pred_fallthru
        _
    $region40: #{net_forward.4} parent=5 // pred_fallthru
      _
  $region6: #{net_forward.4} parent=0 // loop_footer
    %s13 = sadd.s32 1, %s9
  $region7: #{net_forward.4} parent=0 // loop_footer_branch
    %8 = sbr.rel target = $region3
  $region8: #{net_forward.4} parent=0 // loop_exit
    _

// kernel: net_forward.5
$region0: #{net_forward.5}
  #allocation0 [shape = 'u32[]', space=smem, size = 0x4, offset = 0x4, fixed_abs, tag = 'smem constant byte address 0x4 - core index']
  #allocation1 [shape = 'u32[144,128]{1,0:T(1,128)}', space=vmem, size = 0x12000, scoped, tag = 'internal scratch']
  %s0 = inlined_call_operand.vmem [shape: f32[8,256], index: 0, kind: input, shape index: {}]
  %s1 = inlined_call_operand.vmem [shape: f32[128,256], index: 1, kind: input, shape index: {}]
  %s2 = inlined_call_operand.vmem [shape: f32[1,128], index: 2, kind: input, shape index: {}]
  %s3 = inlined_call_operand.vmem [shape: f32[128,128], index: 3, kind: input, shape index: {}]
  %s4 = inlined_call_operand.vmem [shape: f32[1,128], index: 4, kind: input, shape index: {}]
  %s5 = inlined_call_operand.vmem [shape: f32[128,128], index: 5, kind: input, shape index: {}]
  %s6 = inlined_call_operand.vmem [shape: f32[1,128], index: 6, kind: input, shape index: {}]
  %s7 = inlined_call_operand.vmem [shape: f32[8,128], index: 7, kind: output, shape index: {}]
  %s8 = sld [smem:[#allocation0]]
  $region38: #{net_forward.5} parent=0
    _
  %s10 = ssub.s32 1, %s8
  %s11 = scalar_select 0, %s10, %s8
  // Predicated region
  $region2: #{net_forward.5} parent=0 // pred_check
    _
  $region3: #{net_forward.5} parent=0 // pred_check_branch
    %13 = sbr.rel (0) target = $region5
  $region4: #{net_forward.5} parent=0 // pred_region
    _
  $region5: #{net_forward.5} parent=0 // pred_fallthru
    _
  // Predicated region
  $region6: #{net_forward.5} parent=0 // pred_check
    _
  $region7: #{net_forward.5} parent=0 // pred_check_branch
    %15 = sbr.rel (0) target = $region9
  $region8: #{net_forward.5} parent=0 // pred_region
    _
  $region9: #{net_forward.5} parent=0 // pred_fallthru
    _
  // Predicated region
  $region10: #{net_forward.5} parent=0 // pred_check
    _
  $region11: #{net_forward.5} parent=0 // pred_check_branch
    %17 = sbr.rel (0) target = $region13
  $region12: #{net_forward.5} parent=0 // pred_region
    _
  $region13: #{net_forward.5} parent=0 // pred_fallthru
    _
  // Predicated region
  $region14: #{net_forward.5} parent=0 // pred_check
    _
  $region15: #{net_forward.5} parent=0 // pred_check_branch
    %19 = sbr.rel (0) target = $region17
  $region16: #{net_forward.5} parent=0 // pred_region
    _
  $region17: #{net_forward.5} parent=0 // pred_fallthru
    _
  // Predicated region
  $region18: #{net_forward.5} parent=0 // pred_check
    _
  $region19: #{net_forward.5} parent=0 // pred_check_branch
    %21 = sbr.rel (0) target = $region21
  $region20: #{net_forward.5} parent=0 // pred_region
    _
  $region21: #{net_forward.5} parent=0 // pred_fallthru
    _
  // Predicated region
  $region22: #{net_forward.5} parent=0 // pred_check
    _
  $region23: #{net_forward.5} parent=0 // pred_check_branch
    %23 = sbr.rel (0) target = $region25
  $region24: #{net_forward.5} parent=0 // pred_region
    _
  $region25: #{net_forward.5} parent=0 // pred_fallthru
    _
  // Predicated region
  $region26: #{net_forward.5} parent=0 // pred_check
    _
  $region27: #{net_forward.5} parent=0 // pred_check_branch
    %25 = sbr.rel (0) target = $region29
  $region28: #{net_forward.5} parent=0 // pred_region
    _
  $region29: #{net_forward.5} parent=0 // pred_fallthru
    _
  %v26 = vld [vmem:[%s0] sm:$0xff]
  %v27 = vld [vmem:[%s0 + $0x8] sm:$0xff]
  %v28 = vld [vmem:[%s1] sm:$0xff]
  %v29 = vld [vmem:[%s1 + $0x8] sm:$0xff]
  %v30 = vld [vmem:[%s1 + $0x10] sm:$0xff]
  %v31 = vld [vmem:[%s1 + $0x18] sm:$0xff]
  %v32 = vld [vmem:[%s1 + $0x20] sm:$0xff]
  %v33 = vld [vmem:[%s1 + $0x28] sm:$0xff]
  %v34 = vld [vmem:[%s1 + $0x30] sm:$0xff]
  %v35 = vld [vmem:[%s1 + $0x38] sm:$0xff]
  %v36 = vld [vmem:[%s1 + $0x40] sm:$0xff]
  %v37 = vld [vmem:[%s1 + $0x48] sm:$0xff]
  %v38 = vld [vmem:[%s1 + $0x50] sm:$0xff]
  %v39 = vld [vmem:[%s1 + $0x58] sm:$0xff]
  %v40 = vld [vmem:[%s1 + $0x60] sm:$0xff]
  %v41 = vld [vmem:[%s1 + $0x68] sm:$0xff]
  %v42 = vld [vmem:[%s1 + $0x70] sm:$0xff]
  %v43 = vld [vmem:[%s1 + $0x78] sm:$0xff]
  %v44 = vld [vmem:[%s1 + $0x80] sm:$0xff]
  %v45 = vld [vmem:[%s1 + $0x88] sm:$0xff]
  %v46 = vld [vmem:[%s1 + $0x90] sm:$0xff]
  %v47 = vld [vmem:[%s1 + $0x98] sm:$0xff]
  %v48 = vld [vmem:[%s1 + $0xa0] sm:$0xff]
  %v49 = vld [vmem:[%s1 + $0xa8] sm:$0xff]
  %v50 = vld [vmem:[%s1 + $0xb0] sm:$0xff]
  %v51 = vld [vmem:[%s1 + $0xb8] sm:$0xff]
  %v52 = vld [vmem:[%s1 + $0xc0] sm:$0xff]
  %v53 = vld [vmem:[%s1 + $0xc8] sm:$0xff]
  %v54 = vld [vmem:[%s1 + $0xd0] sm:$0xff]
  %v55 = vld [vmem:[%s1 + $0xd8] sm:$0xff]
  %v56 = vld [vmem:[%s1 + $0xe0] sm:$0xff]
  %v57 = vld [vmem:[%s1 + $0xe8] sm:$0xff]
  %v58 = vld [vmem:[%s1 + $0xf0] sm:$0xff]
  %v59 = vld [vmem:[%s1 + $0xf8] sm:$0xff]
  %v60 = vld [vmem:[%s2] sm:$0x1]
  %v62 = vlaneseq
  %v63 = vshrl.u32 %v62, 7
  %v64 = vsub.s32 0, %v63
  %v65 = vrot.slane %v60, %v64
  %67 = vmatprep.subr.mxu0 %v29
  %68 = vmatpush1.xpose.msra.mxu0 %v28
  %69 = vmatprep.subr.mxu0 %v31
  %70 = vmatpush1.xpose.msra.mxu0 %v30
  %71 = vmatprep.subr.mxu0 %v33
  %72 = vmatpush1.xpose.msra.mxu0 %v32
  %73 = vmatprep.subr.mxu0 %v35
  %74 = vmatpush1.xpose.msra.mxu0 %v34
  %75 = vmatprep.subr.mxu0 %v37
  %76 = vmatpush1.xpose.msra.mxu0 %v36
  %77 = vmatprep.subr.mxu0 %v39
  %78 = vmatpush1.xpose.msra.mxu0 %v38
  %79 = vmatprep.subr.mxu0 %v41
  %80 = vmatpush1.xpose.msra.mxu0 %v40
  %81 = vmatprep.subr.mxu0 %v43
  %82 = vmatpush1.xpose.msra.mxu0 %v42
  %83 = vmatprep.subr.mxu0 %v45
  %84 = vmatpush1.xpose.msra.mxu0 %v44
  %85 = vmatprep.subr.mxu0 %v47
  %86 = vmatpush1.xpose.msra.mxu0 %v46
  %87 = vmatprep.subr.mxu0 %v49
  %88 = vmatpush1.xpose.msra.mxu0 %v48
  %89 = vmatprep.subr.mxu0 %v51
  %90 = vmatpush1.xpose.msra.mxu0 %v50
  %91 = vmatprep.subr.mxu0 %v53
  %92 = vmatpush1.xpose.msra.mxu0 %v52
  %93 = vmatprep.subr.mxu0 %v55
  %94 = vmatpush1.xpose.msra.mxu0 %v54
  %95 = vmatprep.subr.mxu0 %v57
  %96 = vmatpush1.xpose.msra.mxu0 %v56
  %97 = vmatprep.subr.mxu0 %v59
  %98 = vmatpush1.xpose.msra.mxu0 %v58
  %99 = vmatprep.subr.mxu0 0.0
  %100 = vmatpush1.xpose.msra.mxu0 0.0
  %101 = vmatprep.subr.mxu0 0.0
  %102 = vmatpush1.xpose.msra.mxu0 0.0
  %103 = vmatprep.subr.mxu0 0.0
  %104 = vmatpush1.xpose.msra.mxu0 0.0
  %105 = vmatprep.subr.mxu0 0.0
  %106 = vmatpush1.xpose.msra.mxu0 0.0
  %107 = vmatprep.subr.mxu0 0.0
  %108 = vmatpush1.xpose.msra.mxu0 0.0
  %109 = vmatprep.subr.mxu0 0.0
  %110 = vmatpush1.xpose.msra.mxu0 0.0
  %111 = vmatprep.subr.mxu0 0.0
  %112 = vmatpush1.xpose.msra.mxu0 0.0
  %113 = vmatprep.subr.mxu0 0.0
  %114 = vmatpush1.xpose.msra.mxu0 0.0
  %115 = vmatprep.subr.mxu0 0.0
  %116 = vmatpush1.xpose.msra.mxu0 0.0
  %117 = vmatprep.subr.mxu0 0.0
  %118 = vmatpush1.xpose.msra.mxu0 0.0
  %119 = vmatprep.subr.mxu0 0.0
  %120 = vmatpush1.xpose.msra.mxu0 0.0
  %121 = vmatprep.subr.mxu0 0.0
  %122 = vmatpush1.xpose.msra.mxu0 0.0
  %123 = vmatprep.subr.mxu0 0.0
  %124 = vmatpush1.xpose.msra.mxu0 0.0
  %125 = vmatprep.subr.mxu0 0.0
  %126 = vmatpush1.xpose.msra.mxu0 0.0
  %127 = vmatprep.subr.mxu0 0.0
  %128 = vmatpush1.xpose.msra.mxu0 0.0
  %129 = vmatprep.subr.mxu0 0.0
  %130 = vmatpush1.xpose.msra.mxu0 0.0
  %131 = vmatprep.mubr.f32.mxu0 %v27
  %132 = vmatmul.mubr.f32.gmra.mrb[0].mxu0 %v26
  %v133 = vpop.f32.mrb[0].mxu0
  %v134 = vadd.f32 %v65, %v133
  %v135 = vpop.f32.mrb[0].mxu0
  %136 = vdwg.mxu0
  %v137 = vmax.f32 %v134, 0.0
  %v138 = vld [vmem:[%s3] sm:$0xff]
  %v139 = vld [vmem:[%s3 + $0x8] sm:$0xff]
  %v140 = vld [vmem:[%s3 + $0x10] sm:$0xff]
  %v141 = vld [vmem:[%s3 + $0x18] sm:$0xff]
  %v142 = vld [vmem:[%s3 + $0x20] sm:$0xff]
  %v143 = vld [vmem:[%s3 + $0x28] sm:$0xff]
  %v144 = vld [vmem:[%s3 + $0x30] sm:$0xff]
  %v145 = vld [vmem:[%s3 + $0x38] sm:$0xff]
  %v146 = vld [vmem:[%s3 + $0x40] sm:$0xff]
  %v147 = vld [vmem:[%s3 + $0x48] sm:$0xff]
  %v148 = vld [vmem:[%s3 + $0x50] sm:$0xff]
  %v149 = vld [vmem:[%s3 + $0x58] sm:$0xff]
  %v150 = vld [vmem:[%s3 + $0x60] sm:$0xff]
  %v151 = vld [vmem:[%s3 + $0x68] sm:$0xff]
  %v152 = vld [vmem:[%s3 + $0x70] sm:$0xff]
  %v153 = vld [vmem:[%s3 + $0x78] sm:$0xff]
  %v154 = vld [vmem:[%s4] sm:$0x1]
  %v156 = vlaneseq
  %v157 = vshrl.u32 %v156, 7
  %v158 = vsub.s32 0, %v157
  %v159 = vrot.slane %v154, %v158
  %161 = vmatprep.subr.mxu0 0.0
  %162 = vmatpush1.xpose.msra.mxu0 %v138
  %163 = vmatprep.subr.mxu0 0.0
  %164 = vmatpush1.xpose.msra.mxu0 %v139
  %165 = vmatprep.subr.mxu0 0.0
  %166 = vmatpush1.xpose.msra.mxu0 %v140
  %167 = vmatprep.subr.mxu0 0.0
  %168 = vmatpush1.xpose.msra.mxu0 %v141
  %169 = vmatprep.subr.mxu0 0.0
  %170 = vmatpush1.xpose.msra.mxu0 %v142
  %171 = vmatprep.subr.mxu0 0.0
  %172 = vmatpush1.xpose.msra.mxu0 %v143
  %173 = vmatprep.subr.mxu0 0.0
  %174 = vmatpush1.xpose.msra.mxu0 %v144
  %175 = vmatprep.subr.mxu0 0.0
  %176 = vmatpush1.xpose.msra.mxu0 %v145
  %177 = vmatprep.subr.mxu0 0.0
  %178 = vmatpush1.xpose.msra.mxu0 %v146
  %179 = vmatprep.subr.mxu0 0.0
  %180 = vmatpush1.xpose.msra.mxu0 %v147
  %181 = vmatprep.subr.mxu0 0.0
  %182 = vmatpush1.xpose.msra.mxu0 %v148
  %183 = vmatprep.subr.mxu0 0.0
  %184 = vmatpush1.xpose.msra.mxu0 %v149
  %185 = vmatprep.subr.mxu0 0.0
  %186 = vmatpush1.xpose.msra.mxu0 %v150
  %187 = vmatprep.subr.mxu0 0.0
  %188 = vmatpush1.xpose.msra.mxu0 %v151
  %189 = vmatprep.subr.mxu0 0.0
  %190 = vmatpush1.xpose.msra.mxu0 %v152
  %191 = vmatprep.subr.mxu0 0.0
  %192 = vmatpush1.xpose.msra.mxu0 %v153
  %193 = vmatprep.subr.mxu0 0.0
  %194 = vmatpush1.xpose.msra.mxu0 0.0
  %195 = vmatprep.subr.mxu0 0.0
  %196 = vmatpush1.xpose.msra.mxu0 0.0
  %197 = vmatprep.subr.mxu0 0.0
  %198 = vmatpush1.xpose.msra.mxu0 0.0
  %199 = vmatprep.subr.mxu0 0.0
  %200 = vmatpush1.xpose.msra.mxu0 0.0
  %201 = vmatprep.subr.mxu0 0.0
  %202 = vmatpush1.xpose.msra.mxu0 0.0
  %203 = vmatprep.subr.mxu0 0.0
  %204 = vmatpush1.xpose.msra.mxu0 0.0
  %205 = vmatprep.subr.mxu0 0.0
  %206 = vmatpush1.xpose.msra.mxu0 0.0
  %207 = vmatprep.subr.mxu0 0.0
  %208 = vmatpush1.xpose.msra.mxu0 0.0
  %209 = vmatprep.subr.mxu0 0.0
  %210 = vmatpush1.xpose.msra.mxu0 0.0
  %211 = vmatprep.subr.mxu0 0.0
  %212 = vmatpush1.xpose.msra.mxu0 0.0
  %213 = vmatprep.subr.mxu0 0.0
  %214 = vmatpush1.xpose.msra.mxu0 0.0
  %215 = vmatprep.subr.mxu0 0.0
  %216 = vmatpush1.xpose.msra.mxu0 0.0
  %217 = vmatprep.subr.mxu0 0.0
  %218 = vmatpush1.xpose.msra.mxu0 0.0
  %219 = vmatprep.subr.mxu0 0.0
  %220 = vmatpush1.xpose.msra.mxu0 0.0
  %221 = vmatprep.subr.mxu0 0.0
  %222 = vmatpush1.xpose.msra.mxu0 0.0
  %223 = vmatprep.subr.mxu0 0.0
  %224 = vmatpush1.xpose.msra.mxu0 0.0
  %225 = vmatprep.mubr.f32.mxu0 0.0
  %226 = vmatmul.mubr.f32.gmra.mrb[0].mxu0 %v137
  %v227 = vpop.f32.mrb[0].mxu0
  %v228 = vadd.f32 %v159, %v227
  %v229 = vpop.f32.mrb[0].mxu0
  %230 = vdwg.mxu0
  %v231 = vmax.f32 %v228, 0.0
  %v232 = vld [vmem:[%s5] sm:$0xff]
  %v233 = vld [vmem:[%s5 + $0x8] sm:$0xff]
  %v234 = vld [vmem:[%s5 + $0x10] sm:$0xff]
  %v235 = vld [vmem:[%s5 + $0x18] sm:$0xff]
  %v236 = vld [vmem:[%s5 + $0x20] sm:$0xff]
  %v237 = vld [vmem:[%s5 + $0x28] sm:$0xff]
  %v238 = vld [vmem:[%s5 + $0x30] sm:$0xff]
  %v239 = vld [vmem:[%s5 + $0x38] sm:$0xff]
  %v240 = vld [vmem:[%s5 + $0x40] sm:$0xff]
  %v241 = vld [vmem:[%s5 + $0x48] sm:$0xff]
  %v242 = vld [vmem:[%s5 + $0x50] sm:$0xff]
  %v243 = vld [vmem:[%s5 + $0x58] sm:$0xff]
  %v244 = vld [vmem:[%s5 + $0x60] sm:$0xff]
  %v245 = vld [vmem:[%s5 + $0x68] sm:$0xff]
  %v246 = vld [vmem:[%s5 + $0x70] sm:$0xff]
  %v247 = vld [vmem:[%s5 + $0x78] sm:$0xff]
  %v248 = vld [vmem:[%s6] sm:$0x1]
  %v250 = vlaneseq
  %v251 = vshrl.u32 %v250, 7
  %v252 = vsub.s32 0, %v251
  %v253 = vrot.slane %v248, %v252
  %255 = vmatprep.subr.mxu0 0.0
  %256 = vmatpush1.xpose.msra.mxu0 %v232
  %257 = vmatprep.subr.mxu0 0.0
  %258 = vmatpush1.xpose.msra.mxu0 %v233
  %259 = vmatprep.subr.mxu0 0.0
  %260 = vmatpush1.xpose.msra.mxu0 %v234
  %261 = vmatprep.subr.mxu0 0.0
  %262 = vmatpush1.xpose.msra.mxu0 %v235
  %263 = vmatprep.subr.mxu0 0.0
  %264 = vmatpush1.xpose.msra.mxu0 %v236
  %265 = vmatprep.subr.mxu0 0.0
  %266 = vmatpush1.xpose.msra.mxu0 %v237
  %267 = vmatprep.subr.mxu0 0.0
  %268 = vmatpush1.xpose.msra.mxu0 %v238
  %269 = vmatprep.subr.mxu0 0.0
  %270 = vmatpush1.xpose.msra.mxu0 %v239
  %271 = vmatprep.subr.mxu0 0.0
  %272 = vmatpush1.xpose.msra.mxu0 %v240
  %273 = vmatprep.subr.mxu0 0.0
  %274 = vmatpush1.xpose.msra.mxu0 %v241
  %275 = vmatprep.subr.mxu0 0.0
  %276 = vmatpush1.xpose.msra.mxu0 %v242
  %277 = vmatprep.subr.mxu0 0.0
  %278 = vmatpush1.xpose.msra.mxu0 %v243
  %279 = vmatprep.subr.mxu0 0.0
  %280 = vmatpush1.xpose.msra.mxu0 %v244
  %281 = vmatprep.subr.mxu0 0.0
  %282 = vmatpush1.xpose.msra.mxu0 %v245
  %283 = vmatprep.subr.mxu0 0.0
  %284 = vmatpush1.xpose.msra.mxu0 %v246
  %285 = vmatprep.subr.mxu0 0.0
  %286 = vmatpush1.xpose.msra.mxu0 %v247
  %287 = vmatprep.subr.mxu0 0.0
  %288 = vmatpush1.xpose.msra.mxu0 0.0
  %289 = vmatprep.subr.mxu0 0.0
  %290 = vmatpush1.xpose.msra.mxu0 0.0
  %291 = vmatprep.subr.mxu0 0.0
  %292 = vmatpush1.xpose.msra.mxu0 0.0
  %293 = vmatprep.subr.mxu0 0.0
  %294 = vmatpush1.xpose.msra.mxu0 0.0
  %295 = vmatprep.subr.mxu0 0.0
  %296 = vmatpush1.xpose.msra.mxu0 0.0
  %297 = vmatprep.subr.mxu0 0.0
  %298 = vmatpush1.xpose.msra.mxu0 0.0
  %299 = vmatprep.subr.mxu0 0.0
  %300 = vmatpush1.xpose.msra.mxu0 0.0
  %301 = vmatprep.subr.mxu0 0.0
  %302 = vmatpush1.xpose.msra.mxu0 0.0
  %303 = vmatprep.subr.mxu0 0.0
  %304 = vmatpush1.xpose.msra.mxu0 0.0
  %305 = vmatprep.subr.mxu0 0.0
  %306 = vmatpush1.xpose.msra.mxu0 0.0
  %307 = vmatprep.subr.mxu0 0.0
  %308 = vmatpush1.xpose.msra.mxu0 0.0
  %309 = vmatprep.subr.mxu0 0.0
  %310 = vmatpush1.xpose.msra.mxu0 0.0
  %311 = vmatprep.subr.mxu0 0.0
  %312 = vmatpush1.xpose.msra.mxu0 0.0
  %313 = vmatprep.subr.mxu0 0.0
  %314 = vmatpush1.xpose.msra.mxu0 0.0
  %315 = vmatprep.subr.mxu0 0.0
  %316 = vmatpush1.xpose.msra.mxu0 0.0
  %317 = vmatprep.subr.mxu0 0.0
  %318 = vmatpush1.xpose.msra.mxu0 0.0
  %319 = vmatprep.mubr.f32.mxu0 0.0
  %320 = vmatmul.mubr.f32.gmra.mrb[0].mxu0 %v231
  %v321 = vpop.f32.mrb[0].mxu0
  %v322 = vadd.f32 %v253, %v321
  %v323 = vpop.f32.mrb[0].mxu0
  %324 = vdwg.mxu0
  %325 = vst [vmem:[%s7] sm:$0xff] %v322
  // Predicated region
  $region30: #{net_forward.5} parent=0 // pred_check
    _
  $region31: #{net_forward.5} parent=0 // pred_check_branch
    %327 = sbr.rel (0) target = $region33
  $region32: #{net_forward.5} parent=0 // pred_region
    _
  $region33: #{net_forward.5} parent=0 // pred_fallthru
    _
  // Predicated region
  $region34: #{net_forward.5} parent=0 // pred_check
    _
  $region35: #{net_forward.5} parent=0 // pred_check_branch
    %329 = sbr.rel (0) target = $region37
  $region36: #{net_forward.5} parent=0 // pred_region
    _
  $region37: #{net_forward.5} parent=0 // pred_fallthru
    _

</llo_original>
